<compile_context>
chip_gen: v6e
topology: v6e:2x2x1
jax: 0.10.0
libtpu: 0.0.40
codegen_flags: <defaults>
</compile_context>

<pallas_src>
import jax
import jax.numpy as jnp
from jax.experimental import pallas as pl
from jax.experimental.pallas import tpu as pltpu

IN_FEATURES = 28 * 28          # 784
HIDDEN = 512
OUT_FEATURES = 10
OUT_PAD = 128                  # lane-dense padded output width (sliced to 10 later)
MAX_TILE_B = 1024              # batch rows per grid step at large batch sizes


def mlp_kernel(x_ref, w1_ref, b1_ref, w2_ref, b2_ref, w3_ref, b3_ref, o_ref):
    # bf16 cast of the streamed f32 activations happens here instead of as a
    # separate XLA pad/convert pass that would re-write all of x to HBM.
    x = x_ref[...].astype(jnp.bfloat16)
    # layer 1: (TILE_B,784) bf16 @ (784,512) bf16 -> f32 acc; bias + ReLU in f32
    h1 = jnp.dot(x, w1_ref[...], preferred_element_type=jnp.float32)
    h1 = jnp.maximum(h1 + b1_ref[...], 0.0)
    # layer 2: (TILE_B,512) @ (512,512)
    h2 = jnp.dot(h1.astype(jnp.bfloat16), w2_ref[...],
                 preferred_element_type=jnp.float32)
    h2 = jnp.maximum(h2 + b2_ref[...], 0.0)
    # layer 3: output padded 10 -> 128 so the store stays lane-dense (no
    # masked vst.msk); bf16 store halves the output HBM traffic.
    logits = jnp.dot(h2.astype(jnp.bfloat16), w3_ref[...],
                     preferred_element_type=jnp.float32) + b3_ref[...]
    o_ref[...] = logits.astype(o_ref.dtype)


def _choose_tile_b(batch):
    """Pick the per-step batch tile.

    * tiny batch  : one full-batch block (block == full dim is always legal).
    * medium batch: exactly 2 steps so v7x's 2 TensorCores both get work.
    * large batch : 1024-row tiles to amortize the ~0.35us/step grid overhead.
    Non-full-dim tiles are multiples of 16 (bf16 sublane packing of the output).
    """
    if batch <= 32:
        return batch
    if batch >= 2 * MAX_TILE_B:
        return MAX_TILE_B
    half = (batch + 1) // 2
    return min(MAX_TILE_B, ((half + 15) // 16) * 16)


def neural_network_forward(x_nchw, params):
    """Forward pass matching NeuralNetwork.forward. x_nchw: (B, 1, 28, 28) f32."""
    w1, b1, w2, b2, w3, b3 = params  # f32, weights stored (in, out)
    B = x_nchw.shape[0]

    # nn.Flatten(): flatten all dims except batch (row-major C,H,W order).
    # A reshape is layout-free -> no extra HBM pass for the activations.
    x = x_nchw.reshape(B, IN_FEATURES).astype(jnp.float32)       # (B, 784)

    # bf16 weights (tiny, one-time); pad the last layer to 128 lane-dense cols.
    w1_p = w1.astype(jnp.bfloat16)                                # (784, 512)
    w2_p = w2.astype(jnp.bfloat16)                                # (512, 512)
    w3_p = jnp.pad(w3, ((0, 0), (0, OUT_PAD - OUT_FEATURES))).astype(jnp.bfloat16)
    b1_p = b1.astype(jnp.float32)                                 # (1, 512)
    b2_p = b2.astype(jnp.float32)                                 # (1, 512)
    b3_p = jnp.pad(b3, ((0, 0), (0, OUT_PAD - OUT_FEATURES))).astype(jnp.float32)

    tile_b = _choose_tile_b(B)
    grid = (pl.cdiv(B, tile_b),)   # boundary block handles B % tile_b != 0
    const = lambda shape: pl.BlockSpec(shape, lambda i: (0,) * len(shape))

    out = pl.pallas_call(
        mlp_kernel,
        out_shape=jax.ShapeDtypeStruct((B, OUT_PAD), jnp.bfloat16),
        grid_spec=pltpu.PrefetchScalarGridSpec(
            num_scalar_prefetch=0,
            grid=grid,
            in_specs=[
                pl.BlockSpec((tile_b, IN_FEATURES), lambda i: (i, 0)),  # x stream
                const(w1_p.shape), const(b1_p.shape),   # weights pinned: constant
                const(w2_p.shape), const(b2_p.shape),   # index_map -> DMA'd once,
                const(w3_p.shape), const(b3_p.shape),   # VMEM-resident all steps
            ],
            out_specs=pl.BlockSpec((tile_b, OUT_PAD), lambda i: (i, 0)),
        ),
        compiler_params=pltpu.CompilerParams(
            dimension_semantics=("parallel",),      # shard batch over v7x's 2 TCs
            vmem_limit_bytes=48 * 1024 * 1024,      # clear v5e's 16 MiB default
        ),
    )(x, w1_p, b1_p, w2_p, b2_p, w3_p, b3_p)

    # drop padded output columns; return f32 logits like the PyTorch module.
    return out[:, :OUT_FEATURES].astype(jnp.float32)


def init_params(key):
    """Deterministic init mimicking nn.Linear's U(-1/sqrt(fan_in), 1/sqrt(fan_in))."""
    def linear(key, fan_in, fan_out):
        kw, kb = jax.random.split(key)
        bound = 1.0 / jnp.sqrt(fan_in)
        # stored as (in, out): transpose of PyTorch's (out, in) weight layout
        w = jax.random.uniform(kw, (fan_in, fan_out), jnp.float32, -bound, bound)
        b = jax.random.uniform(kb, (1, fan_out), jnp.float32, -bound, bound)
        return w, b

    k1, k2, k3 = jax.random.split(key, 3)
    w1, b1 = linear(k1, IN_FEATURES, HIDDEN)
    w2, b2 = linear(k2, HIDDEN, HIDDEN)
    w3, b3 = linear(k3, HIDDEN, OUT_FEATURES)
    return (w1, b1, w2, b2, w3, b3)


def _reference_forward(x_nchw, params):
    """Plain-JAX reference mirroring the kernel's bf16-operand / f32-accumulate path."""
    w1, b1, w2, b2, w3, b3 = params
    xf = x_nchw.reshape(x_nchw.shape[0], -1).astype(jnp.bfloat16)
    h1 = jnp.maximum(
        jnp.dot(xf, w1.astype(jnp.bfloat16), preferred_element_type=jnp.float32) + b1, 0.0)
    h2 = jnp.maximum(
        jnp.dot(h1.astype(jnp.bfloat16), w2.astype(jnp.bfloat16),
                preferred_element_type=jnp.float32) + b2, 0.0)
    return (jnp.dot(h2.astype(jnp.bfloat16), w3.astype(jnp.bfloat16),
                    preferred_element_type=jnp.float32) + b3)


if __name__ == "__main__":
    key = jax.random.PRNGKey(0)
    kx, kp = jax.random.split(key)
    params = init_params(kp)

    # Small MNIST-like batch, NCHW (B=4, C=1, H=28, W=28): single-block path.
    x_small = jax.random.uniform(kx, (4, 1, 28, 28), jnp.float32)
    logits = jax.block_until_ready(neural_network_forward(x_small, params))
    ref = _reference_forward(x_small, params)
    assert logits.shape == (4, OUT_FEATURES) and logits.dtype == jnp.float32
    assert jnp.allclose(logits, ref, atol=2e-2, rtol=2e-2), (
        float(jnp.max(jnp.abs(logits - ref))))

    # Medium batch: exercises the 2-step streamed grid and the partial
    # boundary block (B=300, tile_b=160 -> blocks of 160 and 140 rows).
    x_med = jax.random.uniform(kx, (300, 1, 28, 28), jnp.float32)
    logits_med = jax.block_until_ready(neural_network_forward(x_med, params))
    ref_med = _reference_forward(x_med, params)
    assert logits_med.shape == (300, OUT_FEATURES)
    assert jnp.allclose(logits_med, ref_med, atol=2e-2, rtol=2e-2), (
        float(jnp.max(jnp.abs(logits_med - ref_med))))

    print("KERNEL_OK")
</pallas_src>

<mosaic_0001>
module attributes {stable_mosaic.version = 11 : i64} {
  func.func @mlp_kernel(%arg0: i32, %arg1: memref<4x784xf32, #tpu.memory_space<vmem>>, %arg2: memref<784x512xbf16, #tpu.memory_space<vmem>>, %arg3: memref<1x512xf32, #tpu.memory_space<vmem>>, %arg4: memref<512x512xbf16, #tpu.memory_space<vmem>>, %arg5: memref<1x512xf32, #tpu.memory_space<vmem>>, %arg6: memref<512x128xbf16, #tpu.memory_space<vmem>>, %arg7: memref<1x128xf32, #tpu.memory_space<vmem>>, %arg8: memref<4x128xbf16, #tpu.memory_space<vmem>>) attributes {dimension_semantics = [#tpu.dimension_semantics<parallel>], iteration_bounds = array<i64: 1>, scalar_prefetch = 0 : i64, scratch_operands = 0 : i64, tpu.core_type = #tpu.core_type<tc>, window_params = [{transform_indices = @transform_0, window_bounds = array<i64: 4, 784>}, {pipeline_mode = #tpu.pipeline_mode<synchronous>, transform_indices = @transform_1, window_bounds = array<i64: 784, 512>}, {pipeline_mode = #tpu.pipeline_mode<synchronous>, transform_indices = @transform_2, window_bounds = array<i64: 1, 512>}, {pipeline_mode = #tpu.pipeline_mode<synchronous>, transform_indices = @transform_3, window_bounds = array<i64: 512, 512>}, {pipeline_mode = #tpu.pipeline_mode<synchronous>, transform_indices = @transform_4, window_bounds = array<i64: 1, 512>}, {pipeline_mode = #tpu.pipeline_mode<synchronous>, transform_indices = @transform_5, window_bounds = array<i64: 512, 128>}, {pipeline_mode = #tpu.pipeline_mode<synchronous>, transform_indices = @transform_6, window_bounds = array<i64: 1, 128>}, {transform_indices = @transform_7, window_bounds = array<i64: 4, 128>}]} {
    %c0 = arith.constant 0 : index
    %c0_0 = arith.constant 0 : index
    %0 = vector.load %arg1[%c0, %c0_0] : memref<4x784xf32, #tpu.memory_space<vmem>>, vector<4x784xf32>
    %1 = arith.truncf %0 : vector<4x784xf32> to vector<4x784xbf16>
    %c0_1 = arith.constant 0 : index
    %c0_2 = arith.constant 0 : index
    %2 = vector.load %arg2[%c0_1, %c0_2] : memref<784x512xbf16, #tpu.memory_space<vmem>>, vector<784x512xbf16>
    %cst = arith.constant dense<0.000000e+00> : vector<4x512xf32>
    %3 = tpu.matmul %1, %2, %cst {dimension_numbers = #tpu.dot_dimension_numbers<[1], [0], [0], [1], [0, 0, 1, 1], [], []>} : vector<4x784xbf16>, vector<784x512xbf16>, vector<4x512xf32> -> vector<4x512xf32>
    %c0_3 = arith.constant 0 : index
    %c0_4 = arith.constant 0 : index
    %4 = vector.load %arg3[%c0_3, %c0_4] : memref<1x512xf32, #tpu.memory_space<vmem>>, vector<1x512xf32>
    %5 = vector.broadcast %4 : vector<1x512xf32> to vector<4x512xf32>
    %6 = arith.addf %3, %5 : vector<4x512xf32>
    %cst_5 = arith.constant 0.000000e+00 : f32
    %7 = vector.broadcast %cst_5 : f32 to vector<4x512xf32>
    %8 = arith.maximumf %6, %7 : vector<4x512xf32>
    %9 = arith.truncf %8 : vector<4x512xf32> to vector<4x512xbf16>
    %c0_6 = arith.constant 0 : index
    %c0_7 = arith.constant 0 : index
    %10 = vector.load %arg4[%c0_6, %c0_7] : memref<512x512xbf16, #tpu.memory_space<vmem>>, vector<512x512xbf16>
    %cst_8 = arith.constant dense<0.000000e+00> : vector<4x512xf32>
    %11 = tpu.matmul %9, %10, %cst_8 {dimension_numbers = #tpu.dot_dimension_numbers<[1], [0], [0], [1], [0, 0, 1, 1], [], []>} : vector<4x512xbf16>, vector<512x512xbf16>, vector<4x512xf32> -> vector<4x512xf32>
    %c0_9 = arith.constant 0 : index
    %c0_10 = arith.constant 0 : index
    %12 = vector.load %arg5[%c0_9, %c0_10] : memref<1x512xf32, #tpu.memory_space<vmem>>, vector<1x512xf32>
    %13 = vector.broadcast %12 : vector<1x512xf32> to vector<4x512xf32>
    %14 = arith.addf %11, %13 : vector<4x512xf32>
    %cst_11 = arith.constant 0.000000e+00 : f32
    %15 = vector.broadcast %cst_11 : f32 to vector<4x512xf32>
    %16 = arith.maximumf %14, %15 : vector<4x512xf32>
    %17 = arith.truncf %16 : vector<4x512xf32> to vector<4x512xbf16>
    %c0_12 = arith.constant 0 : index
    %c0_13 = arith.constant 0 : index
    %18 = vector.load %arg6[%c0_12, %c0_13] : memref<512x128xbf16, #tpu.memory_space<vmem>>, vector<512x128xbf16>
    %cst_14 = arith.constant dense<0.000000e+00> : vector<4x128xf32>
    %19 = tpu.matmul %17, %18, %cst_14 {dimension_numbers = #tpu.dot_dimension_numbers<[1], [0], [0], [1], [0, 0, 1, 1], [], []>} : vector<4x512xbf16>, vector<512x128xbf16>, vector<4x128xf32> -> vector<4x128xf32>
    %c0_15 = arith.constant 0 : index
    %c0_16 = arith.constant 0 : index
    %20 = vector.load %arg7[%c0_15, %c0_16] : memref<1x128xf32, #tpu.memory_space<vmem>>, vector<1x128xf32>
    %21 = vector.broadcast %20 : vector<1x128xf32> to vector<4x128xf32>
    %22 = arith.addf %19, %21 : vector<4x128xf32>
    %23 = arith.truncf %22 : vector<4x128xf32> to vector<4x128xbf16>
    %c0_17 = arith.constant 0 : index
    %c0_18 = arith.constant 0 : index
    %24 = vector.load %arg8[%c0_17, %c0_18] : memref<4x128xbf16, #tpu.memory_space<vmem>>, vector<4x128xbf16>
    tpu.vector_store %arg8[%c0_17, %c0_18], %23 {strides = array<i32>} : memref<4x128xbf16, #tpu.memory_space<vmem>>, vector<4x128xbf16>,
    return
  }
  func.func @transform_0(%arg0: i32) -> (i32, i32) {
    %c0_i32 = arith.constant 0 : i32
    %c0_i32_0 = arith.constant 0 : i32
    return %arg0, %c0_i32 : i32, i32
  }
  func.func @transform_1(%arg0: i32) -> (i32, i32) {
    %c0_i32 = arith.constant 0 : i32
    %c0_i32_0 = arith.constant 0 : i32
    %c0_i32_1 = arith.constant 0 : i32
    return %c0_i32, %c0_i32_0 : i32, i32
  }
  func.func @transform_2(%arg0: i32) -> (i32, i32) {
    %c0_i32 = arith.constant 0 : i32
    %c0_i32_0 = arith.constant 0 : i32
    %c0_i32_1 = arith.constant 0 : i32
    return %c0_i32, %c0_i32_0 : i32, i32
  }
  func.func @transform_3(%arg0: i32) -> (i32, i32) {
    %c0_i32 = arith.constant 0 : i32
    %c0_i32_0 = arith.constant 0 : i32
    %c0_i32_1 = arith.constant 0 : i32
    return %c0_i32, %c0_i32_0 : i32, i32
  }
  func.func @transform_4(%arg0: i32) -> (i32, i32) {
    %c0_i32 = arith.constant 0 : i32
    %c0_i32_0 = arith.constant 0 : i32
    %c0_i32_1 = arith.constant 0 : i32
    return %c0_i32, %c0_i32_0 : i32, i32
  }
  func.func @transform_5(%arg0: i32) -> (i32, i32) {
    %c0_i32 = arith.constant 0 : i32
    %c0_i32_0 = arith.constant 0 : i32
    %c0_i32_1 = arith.constant 0 : i32
    return %c0_i32, %c0_i32_0 : i32, i32
  }
  func.func @transform_6(%arg0: i32) -> (i32, i32) {
    %c0_i32 = arith.constant 0 : i32
    %c0_i32_0 = arith.constant 0 : i32
    %c0_i32_1 = arith.constant 0 : i32
    return %c0_i32, %c0_i32_0 : i32, i32
  }
  func.func @transform_7(%arg0: i32) -> (i32, i32) {
    %c0_i32 = arith.constant 0 : i32
    %c0_i32_0 = arith.constant 0 : i32
    return %arg0, %c0_i32 : i32, i32
  }
}

</mosaic_0001>

<llo_original>
// kernel: tpu_custom_call.1
$region0: #{tpu_custom_call.1}
  #allocation0 [shape = 'u32[]', space=smem, size = 0x4, offset = 0x4, fixed_abs, tag = 'smem constant byte address 0x4 - core index']
  #allocation1 [shape = 'u32[144,128]{1,0:T(1,128)}', space=vmem, size = 0x12000, scoped, tag = 'internal scratch']
  %s0 = inlined_call_operand.hbm [shape: f32[4,784], index: 0, kind: input, shape index: {}]
  %s1 = inlined_call_operand.hbm [shape: bf16[784,512], index: 1, kind: input, shape index: {}]
  %s2 = inlined_call_operand.hbm [shape: f32[1,512], index: 2, kind: input, shape index: {}]
  %s3 = inlined_call_operand.hbm [shape: bf16[512,512], index: 3, kind: input, shape index: {}]
  %s4 = inlined_call_operand.vmem [shape: f32[1,512], index: 4, kind: input, shape index: {}]
  %s5 = inlined_call_operand.hbm [shape: bf16[512,128], index: 5, kind: input, shape index: {}]
  %s6 = inlined_call_operand.vmem [shape: f32[1,128], index: 6, kind: input, shape index: {}]
  %s7 = inlined_call_operand.hbm [shape: bf16[4,128], index: 7, kind: output, shape index: {}]
  %s8 = sld [smem:[#allocation0]]
  $region58: #{tpu_custom_call.1} parent=0
    _
  %s10 = ssub.s32 1, %s8
  %s11 = scalar_select 0, %s10, %s8
  $region1: #{tpu_custom_call.1} parent=0
    #allocation2 [shape = 'u8[14336]{0}', space=vmem, size = 0x3800, scoped, tag = 'input window, operand 0, single buffered']
    #allocation3 [shape = 's32[1]{0}', space=sflag, size = 0x4, scoped, tag = 'scoped memory for tpu_custom_call.1']
    #allocation4 [shape = 's32[1]{0}', space=sflag, size = 0x4, scoped, tag = 'scoped memory for tpu_custom_call.1']
    #allocation5 [shape = 'u8[802816]{0}', space=vmem, size = 0xc4000, scoped, tag = 'input window, operand 1, single buffered']
    #allocation6 [shape = 's32[1]{0}', space=sflag, size = 0x4, scoped, tag = 'scoped memory for tpu_custom_call.1']
    #allocation7 [shape = 'u8[2048]{0}', space=vmem, size = 0x800, scoped, tag = 'input window, operand 2, single buffered']
    #allocation8 [shape = 'u8[524288]{0}', space=vmem, size = 0x80000, scoped, tag = 'input window, operand 3, single buffered']
    #allocation9 [shape = 's32[1]{0}', space=sflag, size = 0x4, scoped, tag = 'scoped memory for tpu_custom_call.1']
    #allocation10 [shape = 'u8[131072]{0}', space=vmem, size = 0x20000, scoped, tag = 'input window, operand 5, single buffered']
    #allocation11 [shape = 'u8[1024]{0}', space=vmem, size = 0x400, scoped, tag = 'output window, operand 0, single buffered']
    %12 = vsyncpa [#allocation3], 0
    %13 = vsyncpa [#allocation6], 0
    %14 = vsyncpa [#allocation9], 0
    %15 = vsyncpa [#allocation4], 0
    // Predicated region
    $region2: #{tpu_custom_call.1} parent=1 // pred_check
      _
    $region3: #{tpu_custom_call.1} parent=1 // pred_check_branch
      %17 = sbr.rel (0) target = $region5
    $region4: #{tpu_custom_call.1} parent=1 // pred_region
      %s19 = ssub.s32 448, 448
      %20 = vsyncadd [#allocation3], %s19
      %s22 = sshll.u32 [#allocation2], 4
      %s23 = int_to_ptr.vmem [resolvable:$true] %s22
      %25 = dma.hbm_to_vmem [thread:$0]  %s0, 448, %s23, [#allocation3]
    $region5: #{tpu_custom_call.1} parent=1 // pred_fallthru
      _
    // Predicated region
    $region6: #{tpu_custom_call.1} parent=1 // pred_check
      _
    $region7: #{tpu_custom_call.1} parent=1 // pred_check_branch
      %27 = sbr.rel (0) target = $region9
    $region8: #{tpu_custom_call.1} parent=1 // pred_region
      %s29 = ssub.s32 25088, 25088
      %30 = vsyncadd [#allocation6], %s29
      %s31 = sshll.u32 [#allocation5], 4
      %s32 = int_to_ptr.vmem [resolvable:$true] %s31
      %37 = dma.hbm_to_vmem [thread:$0]  %s1, 25088, %s32, [#allocation6], 256, 256, 16
    $region9: #{tpu_custom_call.1} parent=1 // pred_fallthru
      _
    // Predicated region
    $region10: #{tpu_custom_call.1} parent=1 // pred_check
      _
    $region11: #{tpu_custom_call.1} parent=1 // pred_check_branch
      %39 = sbr.rel (0) target = $region13
    $region12: #{tpu_custom_call.1} parent=1 // pred_region
      %s41 = ssub.s32 64, 64
      %42 = vsyncadd [#allocation6], %s41
      %s44 = sshll.u32 [#allocation7], 4
      %s45 = int_to_ptr.vmem [resolvable:$true] %s44
      %47 = dma.hbm_to_vmem [thread:$0]  %s2, 64, %s45, [#allocation6]
    $region13: #{tpu_custom_call.1} parent=1 // pred_fallthru
      _
    // Predicated region
    $region14: #{tpu_custom_call.1} parent=1 // pred_check
      _
    $region15: #{tpu_custom_call.1} parent=1 // pred_check_branch
      %49 = sbr.rel (0) target = $region17
    $region16: #{tpu_custom_call.1} parent=1 // pred_region
      %s51 = ssub.s32 16384, 16384
      %52 = vsyncadd [#allocation9], %s51
      %s53 = sshll.u32 [#allocation8], 4
      %s54 = int_to_ptr.vmem [resolvable:$true] %s53
      %59 = dma.hbm_to_vmem [thread:$0]  %s3, 16384, %s54, [#allocation9], 256, 256, 16
    $region17: #{tpu_custom_call.1} parent=1 // pred_fallthru
      _
    // Predicated region
    $region18: #{tpu_custom_call.1} parent=1 // pred_check
      _
    $region19: #{tpu_custom_call.1} parent=1 // pred_check_branch
      %61 = sbr.rel (0) target = $region21
    $region20: #{tpu_custom_call.1} parent=1 // pred_region
      _
    $region21: #{tpu_custom_call.1} parent=1 // pred_fallthru
      _
    // Predicated region
    $region22: #{tpu_custom_call.1} parent=1 // pred_check
      _
    $region23: #{tpu_custom_call.1} parent=1 // pred_check_branch
      %63 = sbr.rel (0) target = $region25
    $region24: #{tpu_custom_call.1} parent=1 // pred_region
      %s65 = ssub.s32 4096, 4096
      %66 = vsyncadd [#allocation9], %s65
      %s67 = sshll.u32 [#allocation10], 4
      %s68 = int_to_ptr.vmem [resolvable:$true] %s67
      %73 = dma.hbm_to_vmem [thread:$0]  %s5, 4096, %s68, [#allocation9], 64, 64, 4
    $region25: #{tpu_custom_call.1} parent=1 // pred_fallthru
      _
    // Predicated region
    $region26: #{tpu_custom_call.1} parent=1 // pred_check
      _
    $region27: #{tpu_custom_call.1} parent=1 // pred_check_branch
      %75 = sbr.rel (0) target = $region29
    $region28: #{tpu_custom_call.1} parent=1 // pred_region
      _
    $region29: #{tpu_custom_call.1} parent=1 // pred_fallthru
      _
    // Predicated region
    $region30: #{tpu_custom_call.1} parent=1 // pred_check
      _
    $region31: #{tpu_custom_call.1} parent=1 // pred_check_branch
      %77 = sbr.rel (0) target = $region33
    $region32: #{tpu_custom_call.1} parent=1 // pred_region
      %78 = dma.done [#allocation3], 448
    $region33: #{tpu_custom_call.1} parent=1 // pred_fallthru
      _
    // Predicated region
    $region34: #{tpu_custom_call.1} parent=1 // pred_check
      _
    $region35: #{tpu_custom_call.1} parent=1 // pred_check_branch
      %80 = sbr.rel (0) target = $region37
    $region36: #{tpu_custom_call.1} parent=1 // pred_region
      %81 = dma.done [#allocation6], 25088
    $region37: #{tpu_custom_call.1} parent=1 // pred_fallthru
      _
    // Predicated region
    $region38: #{tpu_custom_call.1} parent=1 // pred_check
      _
    $region39: #{tpu_custom_call.1} parent=1 // pred_check_branch
      %83 = sbr.rel (0) target = $region41
    $region40: #{tpu_custom_call.1} parent=1 // pred_region
      %84 = dma.done [#allocation6], 64
    $region41: #{tpu_custom_call.1} parent=1 // pred_fallthru
      _
    // Predicated region
    $region42: #{tpu_custom_call.1} parent=1 // pred_check
      _
    $region43: #{tpu_custom_call.1} parent=1 // pred_check_branch
      %86 = sbr.rel (0) target = $region45
    $region44: #{tpu_custom_call.1} parent=1 // pred_region
      %87 = dma.done [#allocation9], 16384
    $region45: #{tpu_custom_call.1} parent=1 // pred_fallthru
      _
    // Predicated region
    $region46: #{tpu_custom_call.1} parent=1 // pred_check
      _
    $region47: #{tpu_custom_call.1} parent=1 // pred_check_branch
      %89 = sbr.rel (0) target = $region49
    $region48: #{tpu_custom_call.1} parent=1 // pred_region
      %90 = dma.done [#allocation9], 4096
    $region49: #{tpu_custom_call.1} parent=1 // pred_fallthru
      _
    %v92 = vld [vmem:[#allocation2] sm:$0xff]
    %v93 = vld [vmem:[#allocation2 + $0x8] sm:$0xff]
    %v94 = vld [vmem:[#allocation2 + $0x10] sm:$0xff]
    %v95 = vld [vmem:[#allocation2 + $0x18] sm:$0xf]
    %v99 = vcombine.high %v92, %v92
    %v100 = vcombine.high %v93, %v93
    %v101 = vcombine.high %v94, %v94
    %v105 = vpack.c.bf16 %v92, %v92
    %v106 = vpack.c.bf16 %v99, %v99
    %v107 = vpack.c.bf16 %v93, %v93
    %v108 = vpack.c.bf16 %v100, %v100
    %v109 = vpack.c.bf16 %v94, %v94
    %v110 = vpack.c.bf16 %v101, %v101
    %v111 = vpack.c.bf16 %v95, %v95
    %v112 = vld [vmem:[#allocation5] sm:$0xff]
    %v113 = vld [vmem:[#allocation5 + $0x8] sm:$0xff]
    %v114 = vld [vmem:[#allocation5 + $0x10] sm:$0xff]
    %v115 = vld [vmem:[#allocation5 + $0x18] sm:$0xff]
    %v116 = vld [vmem:[#allocation5 + $0x20] sm:$0xff]
    %v117 = vld [vmem:[#allocation5 + $0x28] sm:$0xff]
    %v118 = vld [vmem:[#allocation5 + $0x30] sm:$0xff]
    %v119 = vld [vmem:[#allocation5 + $0x38] sm:$0xff]
    %v120 = vld [vmem:[#allocation5 + $0x40] sm:$0xff]
    %v121 = vld [vmem:[#allocation5 + $0x48] sm:$0xff]
    %v122 = vld [vmem:[#allocation5 + $0x50] sm:$0xff]
    %v123 = vld [vmem:[#allocation5 + $0x58] sm:$0xff]
    %v124 = vld [vmem:[#allocation5 + $0x60] sm:$0xff]
    %v125 = vld [vmem:[#allocation5 + $0x68] sm:$0xff]
    %v126 = vld [vmem:[#allocation5 + $0x70] sm:$0xff]
    %v127 = vld [vmem:[#allocation5 + $0x78] sm:$0xff]
    %v128 = vld [vmem:[#allocation5 + $0x80] sm:$0xff]
    %v129 = vld [vmem:[#allocation5 + $0x88] sm:$0xff]
    %v130 = vld [vmem:[#allocation5 + $0x90] sm:$0xff]
    %v131 = vld [vmem:[#allocation5 + $0x98] sm:$0xff]
    %v132 = vld [vmem:[#allocation5 + $0xa0] sm:$0xff]
    %v133 = vld [vmem:[#allocation5 + $0xa8] sm:$0xff]
    %v134 = vld [vmem:[#allocation5 + $0xb0] sm:$0xff]
    %v135 = vld [vmem:[#allocation5 + $0xb8] sm:$0xff]
    %v136 = vld [vmem:[#allocation5 + $0xc0] sm:$0xff]
    %v137 = vld [vmem:[#allocation5 + $0xc8] sm:$0xff]
    %v138 = vld [vmem:[#allocation5 + $0xd0] sm:$0xff]
    %v139 = vld [vmem:[#allocation5 + $0xd8] sm:$0xff]
    %v140 = vld [vmem:[#allocation5 + $0xe0] sm:$0xff]
    %v141 = vld [vmem:[#allocation5 + $0xe8] sm:$0xff]
    %v142 = vld [vmem:[#allocation5 + $0xf0] sm:$0xff]
    %v143 = vld [vmem:[#allocation5 + $0xf8] sm:$0xff]
    %v144 = vld [vmem:[#allocation5 + $0x100] sm:$0xff]
    %v145 = vld [vmem:[#allocation5 + $0x108] sm:$0xff]
    %v146 = vld [vmem:[#allocation5 + $0x110] sm:$0xff]
    %v147 = vld [vmem:[#allocation5 + $0x118] sm:$0xff]
    %v148 = vld [vmem:[#allocation5 + $0x120] sm:$0xff]
    %v149 = vld [vmem:[#allocation5 + $0x128] sm:$0xff]
    %v150 = vld [vmem:[#allocation5 + $0x130] sm:$0xff]
    %v151 = vld [vmem:[#allocation5 + $0x138] sm:$0xff]
    %v152 = vld [vmem:[#allocation5 + $0x140] sm:$0xff]
    %v153 = vld [vmem:[#allocation5 + $0x148] sm:$0xff]
    %v154 = vld [vmem:[#allocation5 + $0x150] sm:$0xff]
    %v155 = vld [vmem:[#allocation5 + $0x158] sm:$0xff]
    %v156 = vld [vmem:[#allocation5 + $0x160] sm:$0xff]
    %v157 = vld [vmem:[#allocation5 + $0x168] sm:$0xff]
    %v158 = vld [vmem:[#allocation5 + $0x170] sm:$0xff]
    %v159 = vld [vmem:[#allocation5 + $0x178] sm:$0xff]
    %v160 = vld [vmem:[#allocation5 + $0x180] sm:$0xff]
    %v161 = vld [vmem:[#allocation5 + $0x188] sm:$0xff]
    %v162 = vld [vmem:[#allocation5 + $0x190] sm:$0xff]
    %v163 = vld [vmem:[#allocation5 + $0x198] sm:$0xff]
    %v164 = vld [vmem:[#allocation5 + $0x1a0] sm:$0xff]
    %v165 = vld [vmem:[#allocation5 + $0x1a8] sm:$0xff]
    %v166 = vld [vmem:[#allocation5 + $0x1b0] sm:$0xff]
    %v167 = vld [vmem:[#allocation5 + $0x1b8] sm:$0xff]
    %v168 = vld [vmem:[#allocation5 + $0x1c0] sm:$0xff]
    %v169 = vld [vmem:[#allocation5 + $0x1c8] sm:$0xff]
    %v170 = vld [vmem:[#allocation5 + $0x1d0] sm:$0xff]
    %v171 = vld [vmem:[#allocation5 + $0x1d8] sm:$0xff]
    %v172 = vld [vmem:[#allocation5 + $0x1e0] sm:$0xff]
    %v173 = vld [vmem:[#allocation5 + $0x1e8] sm:$0xff]
    %v174 = vld [vmem:[#allocation5 + $0x1f0] sm:$0xff]
    %v175 = vld [vmem:[#allocation5 + $0x1f8] sm:$0xff]
    %v176 = vld [vmem:[#allocation5 + $0x200] sm:$0xff]
    %v177 = vld [vmem:[#allocation5 + $0x208] sm:$0xff]
    %v178 = vld [vmem:[#allocation5 + $0x210] sm:$0xff]
    %v179 = vld [vmem:[#allocation5 + $0x218] sm:$0xff]
    %v180 = vld [vmem:[#allocation5 + $0x220] sm:$0xff]
    %v181 = vld [vmem:[#allocation5 + $0x228] sm:$0xff]
    %v182 = vld [vmem:[#allocation5 + $0x230] sm:$0xff]
    %v183 = vld [vmem:[#allocation5 + $0x238] sm:$0xff]
    %v184 = vld [vmem:[#allocation5 + $0x240] sm:$0xff]
    %v185 = vld [vmem:[#allocation5 + $0x248] sm:$0xff]
    %v186 = vld [vmem:[#allocation5 + $0x250] sm:$0xff]
    %v187 = vld [vmem:[#allocation5 + $0x258] sm:$0xff]
    %v188 = vld [vmem:[#allocation5 + $0x260] sm:$0xff]
    %v189 = vld [vmem:[#allocation5 + $0x268] sm:$0xff]
    %v190 = vld [vmem:[#allocation5 + $0x270] sm:$0xff]
    %v191 = vld [vmem:[#allocation5 + $0x278] sm:$0xff]
    %v192 = vld [vmem:[#allocation5 + $0x280] sm:$0xff]
    %v193 = vld [vmem:[#allocation5 + $0x288] sm:$0xff]
    %v194 = vld [vmem:[#allocation5 + $0x290] sm:$0xff]
    %v195 = vld [vmem:[#allocation5 + $0x298] sm:$0xff]
    %v196 = vld [vmem:[#allocation5 + $0x2a0] sm:$0xff]
    %v197 = vld [vmem:[#allocation5 + $0x2a8] sm:$0xff]
    %v198 = vld [vmem:[#allocation5 + $0x2b0] sm:$0xff]
    %v199 = vld [vmem:[#allocation5 + $0x2b8] sm:$0xff]
    %v200 = vld [vmem:[#allocation5 + $0x2c0] sm:$0xff]
    %v201 = vld [vmem:[#allocation5 + $0x2c8] sm:$0xff]
    %v202 = vld [vmem:[#allocation5 + $0x2d0] sm:$0xff]
    %v203 = vld [vmem:[#allocation5 + $0x2d8] sm:$0xff]
    %v204 = vld [vmem:[#allocation5 + $0x2e0] sm:$0xff]
    %v205 = vld [vmem:[#allocation5 + $0x2e8] sm:$0xff]
    %v206 = vld [vmem:[#allocation5 + $0x2f0] sm:$0xff]
    %v207 = vld [vmem:[#allocation5 + $0x2f8] sm:$0xff]
    %v208 = vld [vmem:[#allocation5 + $0x300] sm:$0xff]
    %v209 = vld [vmem:[#allocation5 + $0x308] sm:$0xff]
    %v210 = vld [vmem:[#allocation5 + $0x310] sm:$0xff]
    %v211 = vld [vmem:[#allocation5 + $0x318] sm:$0xff]
    %v212 = vld [vmem:[#allocation5 + $0x320] sm:$0xff]
    %v213 = vld [vmem:[#allocation5 + $0x328] sm:$0xff]
    %v214 = vld [vmem:[#allocation5 + $0x330] sm:$0xff]
    %v215 = vld [vmem:[#allocation5 + $0x338] sm:$0xff]
    %v216 = vld [vmem:[#allocation5 + $0x340] sm:$0xff]
    %v217 = vld [vmem:[#allocation5 + $0x348] sm:$0xff]
    %v218 = vld [vmem:[#allocation5 + $0x350] sm:$0xff]
    %v219 = vld [vmem:[#allocation5 + $0x358] sm:$0xff]
    %v220 = vld [vmem:[#allocation5 + $0x360] sm:$0xff]
    %v221 = vld [vmem:[#allocation5 + $0x368] sm:$0xff]
    %v222 = vld [vmem:[#allocation5 + $0x370] sm:$0xff]
    %v223 = vld [vmem:[#allocation5 + $0x378] sm:$0xff]
    %v224 = vld [vmem:[#allocation5 + $0x380] sm:$0xff]
    %v225 = vld [vmem:[#allocation5 + $0x388] sm:$0xff]
    %v226 = vld [vmem:[#allocation5 + $0x390] sm:$0xff]
    %v227 = vld [vmem:[#allocation5 + $0x398] sm:$0xff]
    %v228 = vld [vmem:[#allocation5 + $0x3a0] sm:$0xff]
    %v229 = vld [vmem:[#allocation5 + $0x3a8] sm:$0xff]
    %v230 = vld [vmem:[#allocation5 + $0x3b0] sm:$0xff]
    %v231 = vld [vmem:[#allocation5 + $0x3b8] sm:$0xff]
    %v232 = vld [vmem:[#allocation5 + $0x3c0] sm:$0xff]
    %v233 = vld [vmem:[#allocation5 + $0x3c8] sm:$0xff]
    %v234 = vld [vmem:[#allocation5 + $0x3d0] sm:$0xff]
    %v235 = vld [vmem:[#allocation5 + $0x3d8] sm:$0xff]
    %v236 = vld [vmem:[#allocation5 + $0x3e0] sm:$0xff]
    %v237 = vld [vmem:[#allocation5 + $0x3e8] sm:$0xff]
    %v238 = vld [vmem:[#allocation5 + $0x3f0] sm:$0xff]
    %v239 = vld [vmem:[#allocation5 + $0x3f8] sm:$0xff]
    %v240 = vld [vmem:[#allocation5 + $0x400] sm:$0xff]
    %v241 = vld [vmem:[#allocation5 + $0x408] sm:$0xff]
    %v242 = vld [vmem:[#allocation5 + $0x410] sm:$0xff]
    %v243 = vld [vmem:[#allocation5 + $0x418] sm:$0xff]
    %v244 = vld [vmem:[#allocation5 + $0x420] sm:$0xff]
    %v245 = vld [vmem:[#allocation5 + $0x428] sm:$0xff]
    %v246 = vld [vmem:[#allocation5 + $0x430] sm:$0xff]
    %v247 = vld [vmem:[#allocation5 + $0x438] sm:$0xff]
    %v248 = vld [vmem:[#allocation5 + $0x440] sm:$0xff]
    %v249 = vld [vmem:[#allocation5 + $0x448] sm:$0xff]
    %v250 = vld [vmem:[#allocation5 + $0x450] sm:$0xff]
    %v251 = vld [vmem:[#allocation5 + $0x458] sm:$0xff]
    %v252 = vld [vmem:[#allocation5 + $0x460] sm:$0xff]
    %v253 = vld [vmem:[#allocation5 + $0x468] sm:$0xff]
    %v254 = vld [vmem:[#allocation5 + $0x470] sm:$0xff]
    %v255 = vld [vmem:[#allocation5 + $0x478] sm:$0xff]
    %v256 = vld [vmem:[#allocation5 + $0x480] sm:$0xff]
    %v257 = vld [vmem:[#allocation5 + $0x488] sm:$0xff]
    %v258 = vld [vmem:[#allocation5 + $0x490] sm:$0xff]
    %v259 = vld [vmem:[#allocation5 + $0x498] sm:$0xff]
    %v260 = vld [vmem:[#allocation5 + $0x4a0] sm:$0xff]
    %v261 = vld [vmem:[#allocation5 + $0x4a8] sm:$0xff]
    %v262 = vld [vmem:[#allocation5 + $0x4b0] sm:$0xff]
    %v263 = vld [vmem:[#allocation5 + $0x4b8] sm:$0xff]
    %v264 = vld [vmem:[#allocation5 + $0x4c0] sm:$0xff]
    %v265 = vld [vmem:[#allocation5 + $0x4c8] sm:$0xff]
    %v266 = vld [vmem:[#allocation5 + $0x4d0] sm:$0xff]
    %v267 = vld [vmem:[#allocation5 + $0x4d8] sm:$0xff]
    %v268 = vld [vmem:[#allocation5 + $0x4e0] sm:$0xff]
    %v269 = vld [vmem:[#allocation5 + $0x4e8] sm:$0xff]
    %v270 = vld [vmem:[#allocation5 + $0x4f0] sm:$0xff]
    %v271 = vld [vmem:[#allocation5 + $0x4f8] sm:$0xff]
    %v272 = vld [vmem:[#allocation5 + $0x500] sm:$0xff]
    %v273 = vld [vmem:[#allocation5 + $0x508] sm:$0xff]
    %v274 = vld [vmem:[#allocation5 + $0x510] sm:$0xff]
    %v275 = vld [vmem:[#allocation5 + $0x518] sm:$0xff]
    %v276 = vld [vmem:[#allocation5 + $0x520] sm:$0xff]
    %v277 = vld [vmem:[#allocation5 + $0x528] sm:$0xff]
    %v278 = vld [vmem:[#allocation5 + $0x530] sm:$0xff]
    %v279 = vld [vmem:[#allocation5 + $0x538] sm:$0xff]
    %v280 = vld [vmem:[#allocation5 + $0x540] sm:$0xff]
    %v281 = vld [vmem:[#allocation5 + $0x548] sm:$0xff]
    %v282 = vld [vmem:[#allocation5 + $0x550] sm:$0xff]
    %v283 = vld [vmem:[#allocation5 + $0x558] sm:$0xff]
    %v284 = vld [vmem:[#allocation5 + $0x560] sm:$0xff]
    %v285 = vld [vmem:[#allocation5 + $0x568] sm:$0xff]
    %v286 = vld [vmem:[#allocation5 + $0x570] sm:$0xff]
    %v287 = vld [vmem:[#allocation5 + $0x578] sm:$0xff]
    %v288 = vld [vmem:[#allocation5 + $0x580] sm:$0xff]
    %v289 = vld [vmem:[#allocation5 + $0x588] sm:$0xff]
    %v290 = vld [vmem:[#allocation5 + $0x590] sm:$0xff]
    %v291 = vld [vmem:[#allocation5 + $0x598] sm:$0xff]
    %v292 = vld [vmem:[#allocation5 + $0x5a0] sm:$0xff]
    %v293 = vld [vmem:[#allocation5 + $0x5a8] sm:$0xff]
    %v294 = vld [vmem:[#allocation5 + $0x5b0] sm:$0xff]
    %v295 = vld [vmem:[#allocation5 + $0x5b8] sm:$0xff]
    %v296 = vld [vmem:[#allocation5 + $0x5c0] sm:$0xff]
    %v297 = vld [vmem:[#allocation5 + $0x5c8] sm:$0xff]
    %v298 = vld [vmem:[#allocation5 + $0x5d0] sm:$0xff]
    %v299 = vld [vmem:[#allocation5 + $0x5d8] sm:$0xff]
    %v300 = vld [vmem:[#allocation5 + $0x5e0] sm:$0xff]
    %v301 = vld [vmem:[#allocation5 + $0x5e8] sm:$0xff]
    %v302 = vld [vmem:[#allocation5 + $0x5f0] sm:$0xff]
    %v303 = vld [vmem:[#allocation5 + $0x5f8] sm:$0xff]
    %v304 = vld [vmem:[#allocation5 + $0x600] sm:$0xff]
    %v305 = vld [vmem:[#allocation5 + $0x608] sm:$0xff]
    %v306 = vld [vmem:[#allocation5 + $0x610] sm:$0xff]
    %v307 = vld [vmem:[#allocation5 + $0x618] sm:$0xff]
    %v308 = vld [vmem:[#allocation7] sm:$0xf]
    %v310 = vlaneseq
    %v311 = vshrl.u32 %v310, 7
    %v312 = vsub.s32 0, %v311
    %v313 = vrot.slane %v308, %v312
    %v314 = vlaneseq
    %v315 = vshrl.u32 %v314, 7
    %v316 = vsub.s32 1, %v315
    %v317 = vrot.slane %v308, %v316
    %v318 = vlaneseq
    %v319 = vshrl.u32 %v318, 7
    %v320 = vsub.s32 2, %v319
    %v321 = vrot.slane %v308, %v320
    %v322 = vlaneseq
    %v323 = vshrl.u32 %v322, 7
    %v324 = vsub.s32 3, %v323
    %v325 = vrot.slane %v308, %v324
    %v526 = vunpack.c.l.b16 %v112
    %v527 = vunpack.c.h.b16 %v112
    %v528 = vunpack.c.l.b16 %v113
    %v529 = vunpack.c.h.b16 %v113
    %v530 = vunpack.c.l.b16 %v114
    %v531 = vunpack.c.h.b16 %v114
    %v532 = vunpack.c.l.b16 %v115
    %v533 = vunpack.c.h.b16 %v115
    %v534 = vunpack.c.l.b16 %v116
    %v535 = vunpack.c.h.b16 %v116
    %v536 = vunpack.c.l.b16 %v117
    %v537 = vunpack.c.h.b16 %v117
    %v538 = vunpack.c.l.b16 %v118
    %v539 = vunpack.c.h.b16 %v118
    %v540 = vunpack.c.l.b16 %v119
    %v541 = vunpack.c.h.b16 %v119
    %v542 = vunpack.c.l.b16 %v120
    %v543 = vunpack.c.h.b16 %v120
    %v544 = vunpack.c.l.b16 %v121
    %v545 = vunpack.c.h.b16 %v121
    %v546 = vunpack.c.l.b16 %v122
    %v547 = vunpack.c.h.b16 %v122
    %v548 = vunpack.c.l.b16 %v123
    %v549 = vunpack.c.h.b16 %v123
    %v550 = vunpack.c.l.b16 %v124
    %v551 = vunpack.c.h.b16 %v124
    %v552 = vunpack.c.l.b16 %v125
    %v553 = vunpack.c.h.b16 %v125
    %v554 = vunpack.c.l.b16 %v126
    %v555 = vunpack.c.h.b16 %v126
    %v556 = vunpack.c.l.b16 %v127
    %v557 = vunpack.c.h.b16 %v127
    %v558 = vunpack.c.l.b16 %v128
    %v559 = vunpack.c.h.b16 %v128
    %v560 = vunpack.c.l.b16 %v129
    %v561 = vunpack.c.h.b16 %v129
    %v562 = vunpack.c.l.b16 %v130
    %v563 = vunpack.c.h.b16 %v130
    %v564 = vunpack.c.l.b16 %v131
    %v565 = vunpack.c.h.b16 %v131
    %v566 = vunpack.c.l.b16 %v132
    %v567 = vunpack.c.h.b16 %v132
    %v568 = vunpack.c.l.b16 %v133
    %v569 = vunpack.c.h.b16 %v133
    %v570 = vunpack.c.l.b16 %v134
    %v571 = vunpack.c.h.b16 %v134
    %v572 = vunpack.c.l.b16 %v135
    %v573 = vunpack.c.h.b16 %v135
    %v574 = vunpack.c.l.b16 %v136
    %v575 = vunpack.c.h.b16 %v136
    %v576 = vunpack.c.l.b16 %v137
    %v577 = vunpack.c.h.b16 %v137
    %v578 = vunpack.c.l.b16 %v138
    %v579 = vunpack.c.h.b16 %v138
    %v580 = vunpack.c.l.b16 %v139
    %v581 = vunpack.c.h.b16 %v139
    %v582 = vunpack.c.l.b16 %v140
    %v583 = vunpack.c.h.b16 %v140
    %v584 = vunpack.c.l.b16 %v141
    %v585 = vunpack.c.h.b16 %v141
    %v586 = vunpack.c.l.b16 %v142
    %v587 = vunpack.c.h.b16 %v142
    %v588 = vunpack.c.l.b16 %v143
    %v589 = vunpack.c.h.b16 %v143
    %v590 = vunpack.c.l.b16 %v144
    %v591 = vunpack.c.h.b16 %v144
    %v592 = vunpack.c.l.b16 %v145
    %v593 = vunpack.c.h.b16 %v145
    %v594 = vunpack.c.l.b16 %v146
    %v595 = vunpack.c.h.b16 %v146
    %v596 = vunpack.c.l.b16 %v147
    %v597 = vunpack.c.h.b16 %v147
    %v598 = vunpack.c.l.b16 %v148
    %v599 = vunpack.c.h.b16 %v148
    %v600 = vunpack.c.l.b16 %v149
    %v601 = vunpack.c.h.b16 %v149
    %v602 = vunpack.c.l.b16 %v150
    %v603 = vunpack.c.h.b16 %v150
    %v604 = vunpack.c.l.b16 %v151
    %v605 = vunpack.c.h.b16 %v151
    %v606 = vunpack.c.l.b16 %v152
    %v607 = vunpack.c.h.b16 %v152
    %v608 = vunpack.c.l.b16 %v153
    %v609 = vunpack.c.h.b16 %v153
    %v610 = vunpack.c.l.b16 %v154
    %v611 = vunpack.c.h.b16 %v154
    %v612 = vunpack.c.l.b16 %v155
    %v613 = vunpack.c.h.b16 %v155
    %v614 = vunpack.c.l.b16 %v156
    %v615 = vunpack.c.h.b16 %v156
    %v616 = vunpack.c.l.b16 %v157
    %v617 = vunpack.c.h.b16 %v157
    %v618 = vunpack.c.l.b16 %v158
    %v619 = vunpack.c.h.b16 %v158
    %v620 = vunpack.c.l.b16 %v159
    %v621 = vunpack.c.h.b16 %v159
    %v622 = vunpack.c.l.b16 %v160
    %v623 = vunpack.c.h.b16 %v160
    %v624 = vunpack.c.l.b16 %v161
    %v625 = vunpack.c.h.b16 %v161
    %v626 = vunpack.c.l.b16 %v162
    %v627 = vunpack.c.h.b16 %v162
    %v628 = vunpack.c.l.b16 %v163
    %v629 = vunpack.c.h.b16 %v163
    %v630 = vunpack.c.l.b16 %v164
    %v631 = vunpack.c.h.b16 %v164
    %v632 = vunpack.c.l.b16 %v165
    %v633 = vunpack.c.h.b16 %v165
    %v634 = vunpack.c.l.b16 %v166
    %v635 = vunpack.c.h.b16 %v166
    %v636 = vunpack.c.l.b16 %v167
    %v637 = vunpack.c.h.b16 %v167
    %v638 = vunpack.c.l.b16 %v168
    %v639 = vunpack.c.h.b16 %v168
    %v640 = vunpack.c.l.b16 %v169
    %v641 = vunpack.c.h.b16 %v169
    %v642 = vunpack.c.l.b16 %v170
    %v643 = vunpack.c.h.b16 %v170
    %v644 = vunpack.c.l.b16 %v171
    %v645 = vunpack.c.h.b16 %v171
    %v646 = vunpack.c.l.b16 %v172
    %v647 = vunpack.c.h.b16 %v172
    %v648 = vunpack.c.l.b16 %v173
    %v649 = vunpack.c.h.b16 %v173
    %v650 = vunpack.c.l.b16 %v174
    %v651 = vunpack.c.h.b16 %v174
    %v652 = vunpack.c.l.b16 %v175
    %v653 = vunpack.c.h.b16 %v175
    %v654 = vunpack.c.l.b16 %v176
    %v655 = vunpack.c.h.b16 %v176
    %v656 = vunpack.c.l.b16 %v177
    %v657 = vunpack.c.h.b16 %v177
    %v658 = vunpack.c.l.b16 %v178
    %v659 = vunpack.c.h.b16 %v178
    %v660 = vunpack.c.l.b16 %v179
    %v661 = vunpack.c.h.b16 %v179
    %v662 = vunpack.c.l.b16 %v180
    %v663 = vunpack.c.h.b16 %v180
    %v664 = vunpack.c.l.b16 %v181
    %v665 = vunpack.c.h.b16 %v181
    %v666 = vunpack.c.l.b16 %v182
    %v667 = vunpack.c.h.b16 %v182
    %v668 = vunpack.c.l.b16 %v183
    %v669 = vunpack.c.h.b16 %v183
    %v670 = vunpack.c.l.b16 %v184
    %v671 = vunpack.c.h.b16 %v184
    %v672 = vunpack.c.l.b16 %v185
    %v673 = vunpack.c.h.b16 %v185
    %v674 = vunpack.c.l.b16 %v186
    %v675 = vunpack.c.h.b16 %v186
    %v676 = vunpack.c.l.b16 %v187
    %v677 = vunpack.c.h.b16 %v187
    %v678 = vunpack.c.l.b16 %v188
    %v679 = vunpack.c.h.b16 %v188
    %v680 = vunpack.c.l.b16 %v189
    %v681 = vunpack.c.h.b16 %v189
    %v682 = vunpack.c.l.b16 %v190
    %v683 = vunpack.c.h.b16 %v190
    %v684 = vunpack.c.l.b16 %v191
    %v685 = vunpack.c.h.b16 %v191
    %v686 = vunpack.c.l.b16 %v192
    %v687 = vunpack.c.h.b16 %v192
    %v688 = vunpack.c.l.b16 %v193
    %v689 = vunpack.c.h.b16 %v193
    %v690 = vunpack.c.l.b16 %v194
    %v691 = vunpack.c.h.b16 %v194
    %v692 = vunpack.c.l.b16 %v195
    %v693 = vunpack.c.h.b16 %v195
    %v694 = vunpack.c.l.b16 %v196
    %v695 = vunpack.c.h.b16 %v196
    %v696 = vunpack.c.l.b16 %v197
    %v697 = vunpack.c.h.b16 %v197
    %v698 = vunpack.c.l.b16 %v198
    %v699 = vunpack.c.h.b16 %v198
    %v700 = vunpack.c.l.b16 %v199
    %v701 = vunpack.c.h.b16 %v199
    %v702 = vunpack.c.l.b16 %v200
    %v703 = vunpack.c.h.b16 %v200
    %v704 = vunpack.c.l.b16 %v201
    %v705 = vunpack.c.h.b16 %v201
    %v706 = vunpack.c.l.b16 %v202
    %v707 = vunpack.c.h.b16 %v202
    %v708 = vunpack.c.l.b16 %v203
    %v709 = vunpack.c.h.b16 %v203
    %v710 = vunpack.c.l.b16 %v204
    %v711 = vunpack.c.h.b16 %v204
    %v712 = vunpack.c.l.b16 %v205
    %v713 = vunpack.c.h.b16 %v205
    %v714 = vunpack.c.l.b16 %v206
    %v715 = vunpack.c.h.b16 %v206
    %v716 = vunpack.c.l.b16 %v207
    %v717 = vunpack.c.h.b16 %v207
    %v718 = vunpack.c.l.b16 %v208
    %v719 = vunpack.c.h.b16 %v208
    %v720 = vunpack.c.l.b16 %v209
    %v721 = vunpack.c.h.b16 %v209
    %v722 = vunpack.c.l.b16 %v210
    %v723 = vunpack.c.h.b16 %v210
    %v724 = vunpack.c.l.b16 %v211
    %v725 = vunpack.c.h.b16 %v211
    %v726 = vunpack.c.l.b16 %v212
    %v727 = vunpack.c.h.b16 %v212
    %v728 = vunpack.c.l.b16 %v213
    %v729 = vunpack.c.h.b16 %v213
    %v730 = vunpack.c.l.b16 %v214
    %v731 = vunpack.c.h.b16 %v214
    %v732 = vunpack.c.l.b16 %v215
    %v733 = vunpack.c.h.b16 %v215
    %v734 = vunpack.c.l.b16 %v216
    %v735 = vunpack.c.h.b16 %v216
    %v736 = vunpack.c.l.b16 %v217
    %v737 = vunpack.c.h.b16 %v217
    %v738 = vunpack.c.l.b16 %v218
    %v739 = vunpack.c.h.b16 %v218
    %v740 = vunpack.c.l.b16 %v219
    %v741 = vunpack.c.h.b16 %v219
    %v742 = vunpack.c.l.b16 %v220
    %v743 = vunpack.c.h.b16 %v220
    %v744 = vunpack.c.l.b16 %v221
    %v745 = vunpack.c.h.b16 %v221
    %v746 = vunpack.c.l.b16 %v222
    %v747 = vunpack.c.h.b16 %v222
    %v748 = vunpack.c.l.b16 %v223
    %v749 = vunpack.c.h.b16 %v223
    %v750 = vunpack.c.l.b16 %v224
    %v751 = vunpack.c.h.b16 %v224
    %v752 = vunpack.c.l.b16 %v225
    %v753 = vunpack.c.h.b16 %v225
    %v754 = vunpack.c.l.b16 %v226
    %v755 = vunpack.c.h.b16 %v226
    %v756 = vunpack.c.l.b16 %v227
    %v757 = vunpack.c.h.b16 %v227
    %v758 = vunpack.c.l.b16 %v228
    %v759 = vunpack.c.h.b16 %v228
    %v760 = vunpack.c.l.b16 %v229
    %v761 = vunpack.c.h.b16 %v229
    %v762 = vunpack.c.l.b16 %v230
    %v763 = vunpack.c.h.b16 %v230
    %v764 = vunpack.c.l.b16 %v231
    %v765 = vunpack.c.h.b16 %v231
    %v766 = vunpack.c.l.b16 %v232
    %v767 = vunpack.c.h.b16 %v232
    %v768 = vunpack.c.l.b16 %v233
    %v769 = vunpack.c.h.b16 %v233
    %v770 = vunpack.c.l.b16 %v234
    %v771 = vunpack.c.h.b16 %v234
    %v772 = vunpack.c.l.b16 %v235
    %v773 = vunpack.c.h.b16 %v235
    %v774 = vunpack.c.l.b16 %v236
    %v775 = vunpack.c.h.b16 %v236
    %v776 = vunpack.c.l.b16 %v237
    %v777 = vunpack.c.h.b16 %v237
    %v778 = vunpack.c.l.b16 %v238
    %v779 = vunpack.c.h.b16 %v238
    %v780 = vunpack.c.l.b16 %v239
    %v781 = vunpack.c.h.b16 %v239
    %v782 = vunpack.c.l.b16 %v240
    %v783 = vunpack.c.h.b16 %v240
    %v784 = vunpack.c.l.b16 %v241
    %v785 = vunpack.c.h.b16 %v241
    %v786 = vunpack.c.l.b16 %v242
    %v787 = vunpack.c.h.b16 %v242
    %v788 = vunpack.c.l.b16 %v243
    %v789 = vunpack.c.h.b16 %v243
    %v790 = vunpack.c.l.b16 %v244
    %v791 = vunpack.c.h.b16 %v244
    %v792 = vunpack.c.l.b16 %v245
    %v793 = vunpack.c.h.b16 %v245
    %v794 = vunpack.c.l.b16 %v246
    %v795 = vunpack.c.h.b16 %v246
    %v796 = vunpack.c.l.b16 %v247
    %v797 = vunpack.c.h.b16 %v247
    %v798 = vunpack.c.l.b16 %v248
    %v799 = vunpack.c.h.b16 %v248
    %v800 = vunpack.c.l.b16 %v249
    %v801 = vunpack.c.h.b16 %v249
    %v802 = vunpack.c.l.b16 %v250
    %v803 = vunpack.c.h.b16 %v250
    %v804 = vunpack.c.l.b16 %v251
    %v805 = vunpack.c.h.b16 %v251
    %v806 = vunpack.c.l.b16 %v252
    %v807 = vunpack.c.h.b16 %v252
    %v808 = vunpack.c.l.b16 %v253
    %v809 = vunpack.c.h.b16 %v253
    %v810 = vunpack.c.l.b16 %v254
    %v811 = vunpack.c.h.b16 %v254
    %v812 = vunpack.c.l.b16 %v255
    %v813 = vunpack.c.h.b16 %v255
    %v814 = vunpack.c.l.b16 %v256
    %v815 = vunpack.c.h.b16 %v256
    %v816 = vunpack.c.l.b16 %v257
    %v817 = vunpack.c.h.b16 %v257
    %v818 = vunpack.c.l.b16 %v258
    %v819 = vunpack.c.h.b16 %v258
    %v820 = vunpack.c.l.b16 %v259
    %v821 = vunpack.c.h.b16 %v259
    %v822 = vunpack.c.l.b16 %v260
    %v823 = vunpack.c.h.b16 %v260
    %v824 = vunpack.c.l.b16 %v261
    %v825 = vunpack.c.h.b16 %v261
    %v826 = vunpack.c.l.b16 %v262
    %v827 = vunpack.c.h.b16 %v262
    %v828 = vunpack.c.l.b16 %v263
    %v829 = vunpack.c.h.b16 %v263
    %v830 = vunpack.c.l.b16 %v264
    %v831 = vunpack.c.h.b16 %v264
    %v832 = vunpack.c.l.b16 %v265
    %v833 = vunpack.c.h.b16 %v265
    %v834 = vunpack.c.l.b16 %v266
    %v835 = vunpack.c.h.b16 %v266
    %v836 = vunpack.c.l.b16 %v267
    %v837 = vunpack.c.h.b16 %v267
    %v838 = vunpack.c.l.b16 %v268
    %v839 = vunpack.c.h.b16 %v268
    %v840 = vunpack.c.l.b16 %v269
    %v841 = vunpack.c.h.b16 %v269
    %v842 = vunpack.c.l.b16 %v270
    %v843 = vunpack.c.h.b16 %v270
    %v844 = vunpack.c.l.b16 %v271
    %v845 = vunpack.c.h.b16 %v271
    %v846 = vunpack.c.l.b16 %v272
    %v847 = vunpack.c.h.b16 %v272
    %v848 = vunpack.c.l.b16 %v273
    %v849 = vunpack.c.h.b16 %v273
    %v850 = vunpack.c.l.b16 %v274
    %v851 = vunpack.c.h.b16 %v274
    %v852 = vunpack.c.l.b16 %v275
    %v853 = vunpack.c.h.b16 %v275
    %v854 = vunpack.c.l.b16 %v276
    %v855 = vunpack.c.h.b16 %v276
    %v856 = vunpack.c.l.b16 %v277
    %v857 = vunpack.c.h.b16 %v277
    %v858 = vunpack.c.l.b16 %v278
    %v859 = vunpack.c.h.b16 %v278
    %v860 = vunpack.c.l.b16 %v279
    %v861 = vunpack.c.h.b16 %v279
    %v862 = vunpack.c.l.b16 %v280
    %v863 = vunpack.c.h.b16 %v280
    %v864 = vunpack.c.l.b16 %v281
    %v865 = vunpack.c.h.b16 %v281
    %v866 = vunpack.c.l.b16 %v282
    %v867 = vunpack.c.h.b16 %v282
    %v868 = vunpack.c.l.b16 %v283
    %v869 = vunpack.c.h.b16 %v283
    %v870 = vunpack.c.l.b16 %v284
    %v871 = vunpack.c.h.b16 %v284
    %v872 = vunpack.c.l.b16 %v285
    %v873 = vunpack.c.h.b16 %v285
    %v874 = vunpack.c.l.b16 %v286
    %v875 = vunpack.c.h.b16 %v286
    %v876 = vunpack.c.l.b16 %v287
    %v877 = vunpack.c.h.b16 %v287
    %v878 = vunpack.c.l.b16 %v288
    %v879 = vunpack.c.h.b16 %v288
    %v880 = vunpack.c.l.b16 %v289
    %v881 = vunpack.c.h.b16 %v289
    %v882 = vunpack.c.l.b16 %v290
    %v883 = vunpack.c.h.b16 %v290
    %v884 = vunpack.c.l.b16 %v291
    %v885 = vunpack.c.h.b16 %v291
    %v886 = vunpack.c.l.b16 %v292
    %v887 = vunpack.c.h.b16 %v292
    %v888 = vunpack.c.l.b16 %v293
    %v889 = vunpack.c.h.b16 %v293
    %v890 = vunpack.c.l.b16 %v294
    %v891 = vunpack.c.h.b16 %v294
    %v892 = vunpack.c.l.b16 %v295
    %v893 = vunpack.c.h.b16 %v295
    %v894 = vunpack.c.l.b16 %v296
    %v895 = vunpack.c.h.b16 %v296
    %v896 = vunpack.c.l.b16 %v297
    %v897 = vunpack.c.h.b16 %v297
    %v898 = vunpack.c.l.b16 %v298
    %v899 = vunpack.c.h.b16 %v298
    %v900 = vunpack.c.l.b16 %v299
    %v901 = vunpack.c.h.b16 %v299
    %v902 = vunpack.c.l.b16 %v300
    %v903 = vunpack.c.h.b16 %v300
    %v904 = vunpack.c.l.b16 %v301
    %v905 = vunpack.c.h.b16 %v301
    %v906 = vunpack.c.l.b16 %v302
    %v907 = vunpack.c.h.b16 %v302
    %v908 = vunpack.c.l.b16 %v303
    %v909 = vunpack.c.h.b16 %v303
    %v910 = vunpack.c.l.b16 %v304
    %v911 = vunpack.c.h.b16 %v304
    %v912 = vunpack.c.l.b16 %v305
    %v913 = vunpack.c.h.b16 %v305
    %v914 = vunpack.c.l.b16 %v306
    %v915 = vunpack.c.h.b16 %v306
    %v916 = vunpack.c.l.b16 %v307
    %v917 = vunpack.c.h.b16 %v307
    %v918 = vpack.c.b16 %v530, %v526
    %v919 = vpack.c.b16 %v531, %v527
    %v920 = vpack.c.b16 %v532, %v528
    %v921 = vpack.c.b16 %v533, %v529
    %v922 = vpack.c.b16 %v538, %v534
    %v923 = vpack.c.b16 %v539, %v535
    %v924 = vpack.c.b16 %v540, %v536
    %v925 = vpack.c.b16 %v541, %v537
    %v926 = vpack.c.b16 %v546, %v542
    %v927 = vpack.c.b16 %v547, %v543
    %v928 = vpack.c.b16 %v548, %v544
    %v929 = vpack.c.b16 %v549, %v545
    %v930 = vpack.c.b16 %v554, %v550
    %v931 = vpack.c.b16 %v555, %v551
    %v932 = vpack.c.b16 %v556, %v552
    %v933 = vpack.c.b16 %v557, %v553
    %v934 = vpack.c.b16 %v562, %v558
    %v935 = vpack.c.b16 %v563, %v559
    %v936 = vpack.c.b16 %v564, %v560
    %v937 = vpack.c.b16 %v565, %v561
    %v938 = vpack.c.b16 %v570, %v566
    %v939 = vpack.c.b16 %v571, %v567
    %v940 = vpack.c.b16 %v572, %v568
    %v941 = vpack.c.b16 %v573, %v569
    %v942 = vpack.c.b16 %v578, %v574
    %v943 = vpack.c.b16 %v579, %v575
    %v944 = vpack.c.b16 %v580, %v576
    %v945 = vpack.c.b16 %v581, %v577
    %v946 = vpack.c.b16 %v586, %v582
    %v947 = vpack.c.b16 %v587, %v583
    %v948 = vpack.c.b16 %v588, %v584
    %v949 = vpack.c.b16 %v589, %v585
    %v950 = vpack.c.b16 %v594, %v590
    %v951 = vpack.c.b16 %v595, %v591
    %v952 = vpack.c.b16 %v596, %v592
    %v953 = vpack.c.b16 %v597, %v593
    %v954 = vpack.c.b16 %v602, %v598
    %v955 = vpack.c.b16 %v603, %v599
    %v956 = vpack.c.b16 %v604, %v600
    %v957 = vpack.c.b16 %v605, %v601
    %v958 = vpack.c.b16 %v610, %v606
    %v959 = vpack.c.b16 %v611, %v607
    %v960 = vpack.c.b16 %v612, %v608
    %v961 = vpack.c.b16 %v613, %v609
    %v962 = vpack.c.b16 %v618, %v614
    %v963 = vpack.c.b16 %v619, %v615
    %v964 = vpack.c.b16 %v620, %v616
    %v965 = vpack.c.b16 %v621, %v617
    %v966 = vpack.c.b16 %v626, %v622
    %v967 = vpack.c.b16 %v627, %v623
    %v968 = vpack.c.b16 %v628, %v624
    %v969 = vpack.c.b16 %v629, %v625
    %v970 = vpack.c.b16 %v634, %v630
    %v971 = vpack.c.b16 %v635, %v631
    %v972 = vpack.c.b16 %v636, %v632
    %v973 = vpack.c.b16 %v637, %v633
    %v974 = vpack.c.b16 %v642, %v638
    %v975 = vpack.c.b16 %v643, %v639
    %v976 = vpack.c.b16 %v644, %v640
    %v977 = vpack.c.b16 %v645, %v641
    %v978 = vpack.c.b16 %v650, %v646
    %v979 = vpack.c.b16 %v651, %v647
    %v980 = vpack.c.b16 %v652, %v648
    %v981 = vpack.c.b16 %v653, %v649
    %v982 = vpack.c.b16 %v658, %v654
    %v983 = vpack.c.b16 %v659, %v655
    %v984 = vpack.c.b16 %v660, %v656
    %v985 = vpack.c.b16 %v661, %v657
    %v986 = vpack.c.b16 %v666, %v662
    %v987 = vpack.c.b16 %v667, %v663
    %v988 = vpack.c.b16 %v668, %v664
    %v989 = vpack.c.b16 %v669, %v665
    %v990 = vpack.c.b16 %v674, %v670
    %v991 = vpack.c.b16 %v675, %v671
    %v992 = vpack.c.b16 %v676, %v672
    %v993 = vpack.c.b16 %v677, %v673
    %v994 = vpack.c.b16 %v682, %v678
    %v995 = vpack.c.b16 %v683, %v679
    %v996 = vpack.c.b16 %v684, %v680
    %v997 = vpack.c.b16 %v685, %v681
    %v998 = vpack.c.b16 %v690, %v686
    %v999 = vpack.c.b16 %v691, %v687
    %v1000 = vpack.c.b16 %v692, %v688
    %v1001 = vpack.c.b16 %v693, %v689
    %v1002 = vpack.c.b16 %v698, %v694
    %v1003 = vpack.c.b16 %v699, %v695
    %v1004 = vpack.c.b16 %v700, %v696
    %v1005 = vpack.c.b16 %v701, %v697
    %v1006 = vpack.c.b16 %v706, %v702
    %v1007 = vpack.c.b16 %v707, %v703
    %v1008 = vpack.c.b16 %v708, %v704
    %v1009 = vpack.c.b16 %v709, %v705
    %v1010 = vpack.c.b16 %v714, %v710
    %v1011 = vpack.c.b16 %v715, %v711
    %v1012 = vpack.c.b16 %v716, %v712
    %v1013 = vpack.c.b16 %v717, %v713
    %v1014 = vpack.c.b16 %v722, %v718
    %v1015 = vpack.c.b16 %v723, %v719
    %v1016 = vpack.c.b16 %v724, %v720
    %v1017 = vpack.c.b16 %v725, %v721
    %v1018 = vpack.c.b16 %v730, %v726
    %v1019 = vpack.c.b16 %v731, %v727
    %v1020 = vpack.c.b16 %v732, %v728
    %v1021 = vpack.c.b16 %v733, %v729
    %v1022 = vpack.c.b16 %v738, %v734
    %v1023 = vpack.c.b16 %v739, %v735
    %v1024 = vpack.c.b16 %v740, %v736
    %v1025 = vpack.c.b16 %v741, %v737
    %v1026 = vpack.c.b16 %v746, %v742
    %v1027 = vpack.c.b16 %v747, %v743
    %v1028 = vpack.c.b16 %v748, %v744
    %v1029 = vpack.c.b16 %v749, %v745
    %v1030 = vpack.c.b16 %v754, %v750
    %v1031 = vpack.c.b16 %v755, %v751
    %v1032 = vpack.c.b16 %v756, %v752
    %v1033 = vpack.c.b16 %v757, %v753
    %v1034 = vpack.c.b16 %v762, %v758
    %v1035 = vpack.c.b16 %v763, %v759
    %v1036 = vpack.c.b16 %v764, %v760
    %v1037 = vpack.c.b16 %v765, %v761
    %v1038 = vpack.c.b16 %v770, %v766
    %v1039 = vpack.c.b16 %v771, %v767
    %v1040 = vpack.c.b16 %v772, %v768
    %v1041 = vpack.c.b16 %v773, %v769
    %v1042 = vpack.c.b16 %v778, %v774
    %v1043 = vpack.c.b16 %v779, %v775
    %v1044 = vpack.c.b16 %v780, %v776
    %v1045 = vpack.c.b16 %v781, %v777
    %v1046 = vpack.c.b16 %v786, %v782
    %v1047 = vpack.c.b16 %v787, %v783
    %v1048 = vpack.c.b16 %v788, %v784
    %v1049 = vpack.c.b16 %v789, %v785
    %v1050 = vpack.c.b16 %v794, %v790
    %v1051 = vpack.c.b16 %v795, %v791
    %v1052 = vpack.c.b16 %v796, %v792
    %v1053 = vpack.c.b16 %v797, %v793
    %v1054 = vpack.c.b16 %v802, %v798
    %v1055 = vpack.c.b16 %v803, %v799
    %v1056 = vpack.c.b16 %v804, %v800
    %v1057 = vpack.c.b16 %v805, %v801
    %v1058 = vpack.c.b16 %v810, %v806
    %v1059 = vpack.c.b16 %v811, %v807
    %v1060 = vpack.c.b16 %v812, %v808
    %v1061 = vpack.c.b16 %v813, %v809
    %v1062 = vpack.c.b16 %v818, %v814
    %v1063 = vpack.c.b16 %v819, %v815
    %v1064 = vpack.c.b16 %v820, %v816
    %v1065 = vpack.c.b16 %v821, %v817
    %v1066 = vpack.c.b16 %v826, %v822
    %v1067 = vpack.c.b16 %v827, %v823
    %v1068 = vpack.c.b16 %v828, %v824
    %v1069 = vpack.c.b16 %v829, %v825
    %v1070 = vpack.c.b16 %v834, %v830
    %v1071 = vpack.c.b16 %v835, %v831
    %v1072 = vpack.c.b16 %v836, %v832
    %v1073 = vpack.c.b16 %v837, %v833
    %v1074 = vpack.c.b16 %v842, %v838
    %v1075 = vpack.c.b16 %v843, %v839
    %v1076 = vpack.c.b16 %v844, %v840
    %v1077 = vpack.c.b16 %v845, %v841
    %v1078 = vpack.c.b16 %v850, %v846
    %v1079 = vpack.c.b16 %v851, %v847
    %v1080 = vpack.c.b16 %v852, %v848
    %v1081 = vpack.c.b16 %v853, %v849
    %v1082 = vpack.c.b16 %v858, %v854
    %v1083 = vpack.c.b16 %v859, %v855
    %v1084 = vpack.c.b16 %v860, %v856
    %v1085 = vpack.c.b16 %v861, %v857
    %v1086 = vpack.c.b16 %v866, %v862
    %v1087 = vpack.c.b16 %v867, %v863
    %v1088 = vpack.c.b16 %v868, %v864
    %v1089 = vpack.c.b16 %v869, %v865
    %v1090 = vpack.c.b16 %v874, %v870
    %v1091 = vpack.c.b16 %v875, %v871
    %v1092 = vpack.c.b16 %v876, %v872
    %v1093 = vpack.c.b16 %v877, %v873
    %v1094 = vpack.c.b16 %v882, %v878
    %v1095 = vpack.c.b16 %v883, %v879
    %v1096 = vpack.c.b16 %v884, %v880
    %v1097 = vpack.c.b16 %v885, %v881
    %v1098 = vpack.c.b16 %v890, %v886
    %v1099 = vpack.c.b16 %v891, %v887
    %v1100 = vpack.c.b16 %v892, %v888
    %v1101 = vpack.c.b16 %v893, %v889
    %v1102 = vpack.c.b16 %v898, %v894
    %v1103 = vpack.c.b16 %v899, %v895
    %v1104 = vpack.c.b16 %v900, %v896
    %v1105 = vpack.c.b16 %v901, %v897
    %v1106 = vpack.c.b16 %v906, %v902
    %v1107 = vpack.c.b16 %v907, %v903
    %v1108 = vpack.c.b16 %v908, %v904
    %v1109 = vpack.c.b16 %v909, %v905
    %v1110 = vpack.c.b16 %v914, %v910
    %v1111 = vpack.c.b16 %v915, %v911
    %v1112 = vpack.c.b16 %v916, %v912
    %v1113 = vpack.c.b16 %v917, %v913
    %vm1310 = vcmask 130048
    %v1312 = vsel %vm1310, %v111, 0
    %1314 = vmatprep.subr.bf16.mxu0 %v947
    %1315 = vmatpush1.bf16.msra.mxu0 %v946
    %1316 = vmatprep.subr.bf16.mxu0 %v943
    %1317 = vmatpush1.bf16.msra.mxu0 %v942
    %1318 = vmatprep.subr.bf16.mxu0 %v939
    %1319 = vmatpush1.bf16.msra.mxu0 %v938
    %1320 = vmatprep.subr.bf16.mxu0 %v935
    %1321 = vmatpush1.bf16.msra.mxu0 %v934
    %1322 = vmatprep.subr.bf16.mxu0 %v931
    %1323 = vmatpush1.bf16.msra.mxu0 %v930
    %1324 = vmatprep.subr.bf16.mxu0 %v927
    %1325 = vmatpush1.bf16.msra.mxu0 %v926
    %1326 = vmatprep.subr.bf16.mxu0 %v923
    %1327 = vmatpush1.bf16.msra.mxu0 %v922
    %1328 = vmatprep.subr.bf16.mxu0 %v919
    %1329 = vmatpush1.bf16.msra.mxu0 %v918
    %1330 = vmatprep.subr.bf16.mxu0 %v979
    %1331 = vmatpush2.bf16.msra.mxu0 %v978
    %1332 = vmatprep.subr.bf16.mxu0 %v975
    %1333 = vmatpush2.bf16.msra.mxu0 %v974
    %1334 = vmatprep.subr.bf16.mxu0 %v971
    %1335 = vmatpush2.bf16.msra.mxu0 %v970
    %1336 = vmatprep.subr.bf16.mxu0 %v967
    %1337 = vmatpush2.bf16.msra.mxu0 %v966
    %1338 = vmatprep.subr.bf16.mxu0 %v963
    %1339 = vmatpush2.bf16.msra.mxu0 %v962
    %1340 = vmatprep.subr.bf16.mxu0 %v959
    %1341 = vmatpush2.bf16.msra.mxu0 %v958
    %1342 = vmatprep.subr.bf16.mxu0 %v955
    %1343 = vmatpush2.bf16.msra.mxu0 %v954
    %1344 = vmatprep.subr.bf16.mxu0 %v951
    %1345 = vmatpush2.bf16.msra.mxu0 %v950
    %1346 = vmatprep.mubr.bf16.mxu0 %v106
    %1347 = vmatmul.mubr.bf16.gmra.mxu0 %v105
    %v1348 = vpop.f32.mrf.mxu0
    %v1349 = vadd.f32 %v313, %v1348
    %v1350 = vpop.f32.mrf.mxu0
    %v1351 = vadd.f32 %v317, %v1350
    %v1352 = vpop.f32.mrf.mxu0
    %v1353 = vpop.f32.mrf.mxu0
    %1354 = vdwg.mxu0
    %1355 = vmatprep.subr.bf16.mxu0 %v1011
    %1356 = vmatpush1.bf16.msra.mxu0 %v1010
    %1357 = vmatprep.subr.bf16.mxu0 %v1007
    %1358 = vmatpush1.bf16.msra.mxu0 %v1006
    %1359 = vmatprep.subr.bf16.mxu0 %v1003
    %1360 = vmatpush1.bf16.msra.mxu0 %v1002
    %1361 = vmatprep.subr.bf16.mxu0 %v999
    %1362 = vmatpush1.bf16.msra.mxu0 %v998
    %1363 = vmatprep.subr.bf16.mxu0 %v995
    %1364 = vmatpush1.bf16.msra.mxu0 %v994
    %1365 = vmatprep.subr.bf16.mxu0 %v991
    %1366 = vmatpush1.bf16.msra.mxu0 %v990
    %1367 = vmatprep.subr.bf16.mxu0 %v987
    %1368 = vmatpush1.bf16.msra.mxu0 %v986
    %1369 = vmatprep.subr.bf16.mxu0 %v983
    %1370 = vmatpush1.bf16.msra.mxu0 %v982
    %1371 = vmatprep.subr.bf16.mxu0 %v1043
    %1372 = vmatpush2.bf16.msra.mxu0 %v1042
    %1373 = vmatprep.subr.bf16.mxu0 %v1039
    %1374 = vmatpush2.bf16.msra.mxu0 %v1038
    %1375 = vmatprep.subr.bf16.mxu0 %v1035
    %1376 = vmatpush2.bf16.msra.mxu0 %v1034
    %1377 = vmatprep.subr.bf16.mxu0 %v1031
    %1378 = vmatpush2.bf16.msra.mxu0 %v1030
    %1379 = vmatprep.subr.bf16.mxu0 %v1027
    %1380 = vmatpush2.bf16.msra.mxu0 %v1026
    %1381 = vmatprep.subr.bf16.mxu0 %v1023
    %1382 = vmatpush2.bf16.msra.mxu0 %v1022
    %1383 = vmatprep.subr.bf16.mxu0 %v1019
    %1384 = vmatpush2.bf16.msra.mxu0 %v1018
    %1385 = vmatprep.subr.bf16.mxu0 %v1015
    %1386 = vmatpush2.bf16.msra.mxu0 %v1014
    %1387 = vmatprep.mubr.bf16.mxu0 %v108
    %1388 = vmatmul.mubr.bf16.gmra.mxu0 %v107
    %v1389 = vpop.f32.mrf.mxu0
    %v1390 = vadd.f32 %v1349, %v1389
    %v1391 = vpop.f32.mrf.mxu0
    %v1392 = vadd.f32 %v1351, %v1391
    %v1393 = vpop.f32.mrf.mxu0
    %v1394 = vpop.f32.mrf.mxu0
    %1395 = vdwg.mxu0
    %1396 = vmatprep.subr.bf16.mxu0 %v1075
    %1397 = vmatpush1.bf16.msra.mxu0 %v1074
    %1398 = vmatprep.subr.bf16.mxu0 %v1071
    %1399 = vmatpush1.bf16.msra.mxu0 %v1070
    %1400 = vmatprep.subr.bf16.mxu0 %v1067
    %1401 = vmatpush1.bf16.msra.mxu0 %v1066
    %1402 = vmatprep.subr.bf16.mxu0 %v1063
    %1403 = vmatpush1.bf16.msra.mxu0 %v1062
    %1404 = vmatprep.subr.bf16.mxu0 %v1059
    %1405 = vmatpush1.bf16.msra.mxu0 %v1058
    %1406 = vmatprep.subr.bf16.mxu0 %v1055
    %1407 = vmatpush1.bf16.msra.mxu0 %v1054
    %1408 = vmatprep.subr.bf16.mxu0 %v1051
    %1409 = vmatpush1.bf16.msra.mxu0 %v1050
    %1410 = vmatprep.subr.bf16.mxu0 %v1047
    %1411 = vmatpush1.bf16.msra.mxu0 %v1046
    %1412 = vmatprep.subr.bf16.mxu0 %v1107
    %1413 = vmatpush2.bf16.msra.mxu0 %v1106
    %1414 = vmatprep.subr.bf16.mxu0 %v1103
    %1415 = vmatpush2.bf16.msra.mxu0 %v1102
    %1416 = vmatprep.subr.bf16.mxu0 %v1099
    %1417 = vmatpush2.bf16.msra.mxu0 %v1098
    %1418 = vmatprep.subr.bf16.mxu0 %v1095
    %1419 = vmatpush2.bf16.msra.mxu0 %v1094
    %1420 = vmatprep.subr.bf16.mxu0 %v1091
    %1421 = vmatpush2.bf16.msra.mxu0 %v1090
    %1422 = vmatprep.subr.bf16.mxu0 %v1087
    %1423 = vmatpush2.bf16.msra.mxu0 %v1086
    %1424 = vmatprep.subr.bf16.mxu0 %v1083
    %1425 = vmatpush2.bf16.msra.mxu0 %v1082
    %1426 = vmatprep.subr.bf16.mxu0 %v1079
    %1427 = vmatpush2.bf16.msra.mxu0 %v1078
    %1428 = vmatprep.mubr.bf16.mxu0 %v110
    %1429 = vmatmul.mubr.bf16.gmra.mxu0 %v109
    %v1430 = vpop.f32.mrf.mxu0
    %v1431 = vadd.f32 %v1390, %v1430
    %v1432 = vpop.f32.mrf.mxu0
    %v1433 = vadd.f32 %v1392, %v1432
    %v1434 = vpop.f32.mrf.mxu0
    %v1435 = vpop.f32.mrf.mxu0
    %1436 = vdwg.mxu0
    %1437 = vmatprep.subr.bf16.mxu0 0
    %1438 = vmatpush1.bf16.msra.mxu0 0
    %1439 = vmatprep.subr.bf16.mxu0 0
    %1440 = vmatpush1.bf16.msra.mxu0 0
    %1441 = vmatprep.subr.bf16.mxu0 0
    %1442 = vmatpush1.bf16.msra.mxu0 0
    %1443 = vmatprep.subr.bf16.mxu0 0
    %1444 = vmatpush1.bf16.msra.mxu0 0
    %1445 = vmatprep.subr.bf16.mxu0 0
    %1446 = vmatpush1.bf16.msra.mxu0 0
    %1447 = vmatprep.subr.bf16.mxu0 0
    %1448 = vmatpush1.bf16.msra.mxu0 0
    %1449 = vmatprep.subr.bf16.mxu0 0
    %1450 = vmatpush1.bf16.msra.mxu0 0
    %1451 = vmatprep.subr.bf16.mxu0 %v1111
    %1452 = vmatpush1.bf16.msra.mxu0 %v1110
    %1453 = vmatprep.subr.bf16.mxu0 0
    %1454 = vmatpush2.bf16.msra.mxu0 0
    %1455 = vmatprep.subr.bf16.mxu0 0
    %1456 = vmatpush2.bf16.msra.mxu0 0
    %1457 = vmatprep.subr.bf16.mxu0 0
    %1458 = vmatpush2.bf16.msra.mxu0 0
    %1459 = vmatprep.subr.bf16.mxu0 0
    %1460 = vmatpush2.bf16.msra.mxu0 0
    %1461 = vmatprep.subr.bf16.mxu0 0
    %1462 = vmatpush2.bf16.msra.mxu0 0
    %1463 = vmatprep.subr.bf16.mxu0 0
    %1464 = vmatpush2.bf16.msra.mxu0 0
    %1465 = vmatprep.subr.bf16.mxu0 0
    %1466 = vmatpush2.bf16.msra.mxu0 0
    %1467 = vmatprep.subr.bf16.mxu0 0
    %1468 = vmatpush2.bf16.msra.mxu0 0
    %1469 = vmatprep.mubr.bf16.mxu0 0
    %1470 = vmatmul.mubr.bf16.gmra.mxu0 %v1312
    %v1471 = vpop.f32.mrf.mxu0
    %v1472 = vadd.f32 %v1431, %v1471
    %v1473 = vpop.f32.mrf.mxu0
    %v1474 = vadd.f32 %v1433, %v1473
    %v1475 = vpop.f32.mrf.mxu0
    %v1476 = vpop.f32.mrf.mxu0
    %1477 = vdwg.mxu0
    %1478 = vmatprep.subr.bf16.mxu0 %v949
    %1479 = vmatpush1.bf16.msra.mxu0 %v948
    %1480 = vmatprep.subr.bf16.mxu0 %v945
    %1481 = vmatpush1.bf16.msra.mxu0 %v944
    %1482 = vmatprep.subr.bf16.mxu0 %v941
    %1483 = vmatpush1.bf16.msra.mxu0 %v940
    %1484 = vmatprep.subr.bf16.mxu0 %v937
    %1485 = vmatpush1.bf16.msra.mxu0 %v936
    %1486 = vmatprep.subr.bf16.mxu0 %v933
    %1487 = vmatpush1.bf16.msra.mxu0 %v932
    %1488 = vmatprep.subr.bf16.mxu0 %v929
    %1489 = vmatpush1.bf16.msra.mxu0 %v928
    %1490 = vmatprep.subr.bf16.mxu0 %v925
    %1491 = vmatpush1.bf16.msra.mxu0 %v924
    %1492 = vmatprep.subr.bf16.mxu0 %v921
    %1493 = vmatpush1.bf16.msra.mxu0 %v920
    %1494 = vmatprep.subr.bf16.mxu0 %v981
    %1495 = vmatpush2.bf16.msra.mxu0 %v980
    %1496 = vmatprep.subr.bf16.mxu0 %v977
    %1497 = vmatpush2.bf16.msra.mxu0 %v976
    %1498 = vmatprep.subr.bf16.mxu0 %v973
    %1499 = vmatpush2.bf16.msra.mxu0 %v972
    %1500 = vmatprep.subr.bf16.mxu0 %v969
    %1501 = vmatpush2.bf16.msra.mxu0 %v968
    %1502 = vmatprep.subr.bf16.mxu0 %v965
    %1503 = vmatpush2.bf16.msra.mxu0 %v964
    %1504 = vmatprep.subr.bf16.mxu0 %v961
    %1505 = vmatpush2.bf16.msra.mxu0 %v960
    %1506 = vmatprep.subr.bf16.mxu0 %v957
    %1507 = vmatpush2.bf16.msra.mxu0 %v956
    %1508 = vmatprep.subr.bf16.mxu0 %v953
    %1509 = vmatpush2.bf16.msra.mxu0 %v952
    %1510 = vmatprep.mubr.bf16.mxu0 %v106
    %1511 = vmatmul.mubr.bf16.gmra.mxu0 %v105
    %v1512 = vpop.f32.mrf.mxu0
    %v1513 = vadd.f32 %v321, %v1512
    %v1514 = vpop.f32.mrf.mxu0
    %v1515 = vadd.f32 %v325, %v1514
    %v1516 = vpop.f32.mrf.mxu0
    %v1517 = vpop.f32.mrf.mxu0
    %1518 = vdwg.mxu0
    %1519 = vmatprep.subr.bf16.mxu0 %v1013
    %1520 = vmatpush1.bf16.msra.mxu0 %v1012
    %1521 = vmatprep.subr.bf16.mxu0 %v1009
    %1522 = vmatpush1.bf16.msra.mxu0 %v1008
    %1523 = vmatprep.subr.bf16.mxu0 %v1005
    %1524 = vmatpush1.bf16.msra.mxu0 %v1004
    %1525 = vmatprep.subr.bf16.mxu0 %v1001
    %1526 = vmatpush1.bf16.msra.mxu0 %v1000
    %1527 = vmatprep.subr.bf16.mxu0 %v997
    %1528 = vmatpush1.bf16.msra.mxu0 %v996
    %1529 = vmatprep.subr.bf16.mxu0 %v993
    %1530 = vmatpush1.bf16.msra.mxu0 %v992
    %1531 = vmatprep.subr.bf16.mxu0 %v989
    %1532 = vmatpush1.bf16.msra.mxu0 %v988
    %1533 = vmatprep.subr.bf16.mxu0 %v985
    %1534 = vmatpush1.bf16.msra.mxu0 %v984
    %1535 = vmatprep.subr.bf16.mxu0 %v1045
    %1536 = vmatpush2.bf16.msra.mxu0 %v1044
    %1537 = vmatprep.subr.bf16.mxu0 %v1041
    %1538 = vmatpush2.bf16.msra.mxu0 %v1040
    %1539 = vmatprep.subr.bf16.mxu0 %v1037
    %1540 = vmatpush2.bf16.msra.mxu0 %v1036
    %1541 = vmatprep.subr.bf16.mxu0 %v1033
    %1542 = vmatpush2.bf16.msra.mxu0 %v1032
    %1543 = vmatprep.subr.bf16.mxu0 %v1029
    %1544 = vmatpush2.bf16.msra.mxu0 %v1028
    %1545 = vmatprep.subr.bf16.mxu0 %v1025
    %1546 = vmatpush2.bf16.msra.mxu0 %v1024
    %1547 = vmatprep.subr.bf16.mxu0 %v1021
    %1548 = vmatpush2.bf16.msra.mxu0 %v1020
    %1549 = vmatprep.subr.bf16.mxu0 %v1017
    %1550 = vmatpush2.bf16.msra.mxu0 %v1016
    %1551 = vmatprep.mubr.bf16.mxu0 %v108
    %1552 = vmatmul.mubr.bf16.gmra.mxu0 %v107
    %v1553 = vpop.f32.mrf.mxu0
    %v1554 = vadd.f32 %v1513, %v1553
    %v1555 = vpop.f32.mrf.mxu0
    %v1556 = vadd.f32 %v1515, %v1555
    %v1557 = vpop.f32.mrf.mxu0
    %v1558 = vpop.f32.mrf.mxu0
    %1559 = vdwg.mxu0
    %1560 = vmatprep.subr.bf16.mxu0 %v1077
    %1561 = vmatpush1.bf16.msra.mxu0 %v1076
    %1562 = vmatprep.subr.bf16.mxu0 %v1073
    %1563 = vmatpush1.bf16.msra.mxu0 %v1072
    %1564 = vmatprep.subr.bf16.mxu0 %v1069
    %1565 = vmatpush1.bf16.msra.mxu0 %v1068
    %1566 = vmatprep.subr.bf16.mxu0 %v1065
    %1567 = vmatpush1.bf16.msra.mxu0 %v1064
    %1568 = vmatprep.subr.bf16.mxu0 %v1061
    %1569 = vmatpush1.bf16.msra.mxu0 %v1060
    %1570 = vmatprep.subr.bf16.mxu0 %v1057
    %1571 = vmatpush1.bf16.msra.mxu0 %v1056
    %1572 = vmatprep.subr.bf16.mxu0 %v1053
    %1573 = vmatpush1.bf16.msra.mxu0 %v1052
    %1574 = vmatprep.subr.bf16.mxu0 %v1049
    %1575 = vmatpush1.bf16.msra.mxu0 %v1048
    %1576 = vmatprep.subr.bf16.mxu0 %v1109
    %1577 = vmatpush2.bf16.msra.mxu0 %v1108
    %1578 = vmatprep.subr.bf16.mxu0 %v1105
    %1579 = vmatpush2.bf16.msra.mxu0 %v1104
    %1580 = vmatprep.subr.bf16.mxu0 %v1101
    %1581 = vmatpush2.bf16.msra.mxu0 %v1100
    %1582 = vmatprep.subr.bf16.mxu0 %v1097
    %1583 = vmatpush2.bf16.msra.mxu0 %v1096
    %1584 = vmatprep.subr.bf16.mxu0 %v1093
    %1585 = vmatpush2.bf16.msra.mxu0 %v1092
    %1586 = vmatprep.subr.bf16.mxu0 %v1089
    %1587 = vmatpush2.bf16.msra.mxu0 %v1088
    %1588 = vmatprep.subr.bf16.mxu0 %v1085
    %1589 = vmatpush2.bf16.msra.mxu0 %v1084
    %1590 = vmatprep.subr.bf16.mxu0 %v1081
    %1591 = vmatpush2.bf16.msra.mxu0 %v1080
    %1592 = vmatprep.mubr.bf16.mxu0 %v110
    %1593 = vmatmul.mubr.bf16.gmra.mxu0 %v109
    %v1594 = vpop.f32.mrf.mxu0
    %v1595 = vadd.f32 %v1554, %v1594
    %v1596 = vpop.f32.mrf.mxu0
    %v1597 = vadd.f32 %v1556, %v1596
    %v1598 = vpop.f32.mrf.mxu0
    %v1599 = vpop.f32.mrf.mxu0
    %1600 = vdwg.mxu0
    %1601 = vmatprep.subr.bf16.mxu0 0
    %1602 = vmatpush1.bf16.msra.mxu0 0
    %1603 = vmatprep.subr.bf16.mxu0 0
    %1604 = vmatpush1.bf16.msra.mxu0 0
    %1605 = vmatprep.subr.bf16.mxu0 0
    %1606 = vmatpush1.bf16.msra.mxu0 0
    %1607 = vmatprep.subr.bf16.mxu0 0
    %1608 = vmatpush1.bf16.msra.mxu0 0
    %1609 = vmatprep.subr.bf16.mxu0 0
    %1610 = vmatpush1.bf16.msra.mxu0 0
    %1611 = vmatprep.subr.bf16.mxu0 0
    %1612 = vmatpush1.bf16.msra.mxu0 0
    %1613 = vmatprep.subr.bf16.mxu0 0
    %1614 = vmatpush1.bf16.msra.mxu0 0
    %1615 = vmatprep.subr.bf16.mxu0 %v1113
    %1616 = vmatpush1.bf16.msra.mxu0 %v1112
    %1617 = vmatprep.subr.bf16.mxu0 0
    %1618 = vmatpush2.bf16.msra.mxu0 0
    %1619 = vmatprep.subr.bf16.mxu0 0
    %1620 = vmatpush2.bf16.msra.mxu0 0
    %1621 = vmatprep.subr.bf16.mxu0 0
    %1622 = vmatpush2.bf16.msra.mxu0 0
    %1623 = vmatprep.subr.bf16.mxu0 0
    %1624 = vmatpush2.bf16.msra.mxu0 0
    %1625 = vmatprep.subr.bf16.mxu0 0
    %1626 = vmatpush2.bf16.msra.mxu0 0
    %1627 = vmatprep.subr.bf16.mxu0 0
    %1628 = vmatpush2.bf16.msra.mxu0 0
    %1629 = vmatprep.subr.bf16.mxu0 0
    %1630 = vmatpush2.bf16.msra.mxu0 0
    %1631 = vmatprep.subr.bf16.mxu0 0
    %1632 = vmatpush2.bf16.msra.mxu0 0
    %1633 = vmatprep.mubr.bf16.mxu0 0
    %1634 = vmatmul.mubr.bf16.gmra.mxu0 %v1312
    %v1635 = vpop.f32.mrf.mxu0
    %v1636 = vadd.f32 %v1595, %v1635
    %v1637 = vpop.f32.mrf.mxu0
    %v1638 = vadd.f32 %v1597, %v1637
    %v1639 = vpop.f32.mrf.mxu0
    %v1640 = vpop.f32.mrf.mxu0
    %1641 = vdwg.mxu0
    %v1642 = vmax.f32 %v1472, 0.0
    %v1643 = vmax.f32 %v1474, 0.0
    %v1644 = vmax.f32 %v1636, 0.0
    %v1645 = vmax.f32 %v1638, 0.0
    %v1646 = vpack.c.bf16 %v1642, %v1642
    %v1647 = vpack.c.bf16 %v1643, %v1643
    %v1648 = vpack.c.bf16 %v1644, %v1644
    %v1649 = vpack.c.bf16 %v1645, %v1645
    %v1650 = vld [vmem:[#allocation8] sm:$0xff]
    %v1651 = vld [vmem:[#allocation8 + $0x8] sm:$0xff]
    %v1652 = vld [vmem:[#allocation8 + $0x10] sm:$0xff]
    %v1653 = vld [vmem:[#allocation8 + $0x18] sm:$0xff]
    %v1654 = vld [vmem:[#allocation8 + $0x20] sm:$0xff]
    %v1655 = vld [vmem:[#allocation8 + $0x28] sm:$0xff]
    %v1656 = vld [vmem:[#allocation8 + $0x30] sm:$0xff]
    %v1657 = vld [vmem:[#allocation8 + $0x38] sm:$0xff]
    %v1658 = vld [vmem:[#allocation8 + $0x40] sm:$0xff]
    %v1659 = vld [vmem:[#allocation8 + $0x48] sm:$0xff]
    %v1660 = vld [vmem:[#allocation8 + $0x50] sm:$0xff]
    %v1661 = vld [vmem:[#allocation8 + $0x58] sm:$0xff]
    %v1662 = vld [vmem:[#allocation8 + $0x60] sm:$0xff]
    %v1663 = vld [vmem:[#allocation8 + $0x68] sm:$0xff]
    %v1664 = vld [vmem:[#allocation8 + $0x70] sm:$0xff]
    %v1665 = vld [vmem:[#allocation8 + $0x78] sm:$0xff]
    %v1666 = vld [vmem:[#allocation8 + $0x80] sm:$0xff]
    %v1667 = vld [vmem:[#allocation8 + $0x88] sm:$0xff]
    %v1668 = vld [vmem:[#allocation8 + $0x90] sm:$0xff]
    %v1669 = vld [vmem:[#allocation8 + $0x98] sm:$0xff]
    %v1670 = vld [vmem:[#allocation8 + $0xa0] sm:$0xff]
    %v1671 = vld [vmem:[#allocation8 + $0xa8] sm:$0xff]
    %v1672 = vld [vmem:[#allocation8 + $0xb0] sm:$0xff]
    %v1673 = vld [vmem:[#allocation8 + $0xb8] sm:$0xff]
    %v1674 = vld [vmem:[#allocation8 + $0xc0] sm:$0xff]
    %v1675 = vld [vmem:[#allocation8 + $0xc8] sm:$0xff]
    %v1676 = vld [vmem:[#allocation8 + $0xd0] sm:$0xff]
    %v1677 = vld [vmem:[#allocation8 + $0xd8] sm:$0xff]
    %v1678 = vld [vmem:[#allocation8 + $0xe0] sm:$0xff]
    %v1679 = vld [vmem:[#allocation8 + $0xe8] sm:$0xff]
    %v1680 = vld [vmem:[#allocation8 + $0xf0] sm:$0xff]
    %v1681 = vld [vmem:[#allocation8 + $0xf8] sm:$0xff]
    %v1682 = vld [vmem:[#allocation8 + $0x100] sm:$0xff]
    %v1683 = vld [vmem:[#allocation8 + $0x108] sm:$0xff]
    %v1684 = vld [vmem:[#allocation8 + $0x110] sm:$0xff]
    %v1685 = vld [vmem:[#allocation8 + $0x118] sm:$0xff]
    %v1686 = vld [vmem:[#allocation8 + $0x120] sm:$0xff]
    %v1687 = vld [vmem:[#allocation8 + $0x128] sm:$0xff]
    %v1688 = vld [vmem:[#allocation8 + $0x130] sm:$0xff]
    %v1689 = vld [vmem:[#allocation8 + $0x138] sm:$0xff]
    %v1690 = vld [vmem:[#allocation8 + $0x140] sm:$0xff]
    %v1691 = vld [vmem:[#allocation8 + $0x148] sm:$0xff]
    %v1692 = vld [vmem:[#allocation8 + $0x150] sm:$0xff]
    %v1693 = vld [vmem:[#allocation8 + $0x158] sm:$0xff]
    %v1694 = vld [vmem:[#allocation8 + $0x160] sm:$0xff]
    %v1695 = vld [vmem:[#allocation8 + $0x168] sm:$0xff]
    %v1696 = vld [vmem:[#allocation8 + $0x170] sm:$0xff]
    %v1697 = vld [vmem:[#allocation8 + $0x178] sm:$0xff]
    %v1698 = vld [vmem:[#allocation8 + $0x180] sm:$0xff]
    %v1699 = vld [vmem:[#allocation8 + $0x188] sm:$0xff]
    %v1700 = vld [vmem:[#allocation8 + $0x190] sm:$0xff]
    %v1701 = vld [vmem:[#allocation8 + $0x198] sm:$0xff]
    %v1702 = vld [vmem:[#allocation8 + $0x1a0] sm:$0xff]
    %v1703 = vld [vmem:[#allocation8 + $0x1a8] sm:$0xff]
    %v1704 = vld [vmem:[#allocation8 + $0x1b0] sm:$0xff]
    %v1705 = vld [vmem:[#allocation8 + $0x1b8] sm:$0xff]
    %v1706 = vld [vmem:[#allocation8 + $0x1c0] sm:$0xff]
    %v1707 = vld [vmem:[#allocation8 + $0x1c8] sm:$0xff]
    %v1708 = vld [vmem:[#allocation8 + $0x1d0] sm:$0xff]
    %v1709 = vld [vmem:[#allocation8 + $0x1d8] sm:$0xff]
    %v1710 = vld [vmem:[#allocation8 + $0x1e0] sm:$0xff]
    %v1711 = vld [vmem:[#allocation8 + $0x1e8] sm:$0xff]
    %v1712 = vld [vmem:[#allocation8 + $0x1f0] sm:$0xff]
    %v1713 = vld [vmem:[#allocation8 + $0x1f8] sm:$0xff]
    %v1714 = vld [vmem:[#allocation8 + $0x200] sm:$0xff]
    %v1715 = vld [vmem:[#allocation8 + $0x208] sm:$0xff]
    %v1716 = vld [vmem:[#allocation8 + $0x210] sm:$0xff]
    %v1717 = vld [vmem:[#allocation8 + $0x218] sm:$0xff]
    %v1718 = vld [vmem:[#allocation8 + $0x220] sm:$0xff]
    %v1719 = vld [vmem:[#allocation8 + $0x228] sm:$0xff]
    %v1720 = vld [vmem:[#allocation8 + $0x230] sm:$0xff]
    %v1721 = vld [vmem:[#allocation8 + $0x238] sm:$0xff]
    %v1722 = vld [vmem:[#allocation8 + $0x240] sm:$0xff]
    %v1723 = vld [vmem:[#allocation8 + $0x248] sm:$0xff]
    %v1724 = vld [vmem:[#allocation8 + $0x250] sm:$0xff]
    %v1725 = vld [vmem:[#allocation8 + $0x258] sm:$0xff]
    %v1726 = vld [vmem:[#allocation8 + $0x260] sm:$0xff]
    %v1727 = vld [vmem:[#allocation8 + $0x268] sm:$0xff]
    %v1728 = vld [vmem:[#allocation8 + $0x270] sm:$0xff]
    %v1729 = vld [vmem:[#allocation8 + $0x278] sm:$0xff]
    %v1730 = vld [vmem:[#allocation8 + $0x280] sm:$0xff]
    %v1731 = vld [vmem:[#allocation8 + $0x288] sm:$0xff]
    %v1732 = vld [vmem:[#allocation8 + $0x290] sm:$0xff]
    %v1733 = vld [vmem:[#allocation8 + $0x298] sm:$0xff]
    %v1734 = vld [vmem:[#allocation8 + $0x2a0] sm:$0xff]
    %v1735 = vld [vmem:[#allocation8 + $0x2a8] sm:$0xff]
    %v1736 = vld [vmem:[#allocation8 + $0x2b0] sm:$0xff]
    %v1737 = vld [vmem:[#allocation8 + $0x2b8] sm:$0xff]
    %v1738 = vld [vmem:[#allocation8 + $0x2c0] sm:$0xff]
    %v1739 = vld [vmem:[#allocation8 + $0x2c8] sm:$0xff]
    %v1740 = vld [vmem:[#allocation8 + $0x2d0] sm:$0xff]
    %v1741 = vld [vmem:[#allocation8 + $0x2d8] sm:$0xff]
    %v1742 = vld [vmem:[#allocation8 + $0x2e0] sm:$0xff]
    %v1743 = vld [vmem:[#allocation8 + $0x2e8] sm:$0xff]
    %v1744 = vld [vmem:[#allocation8 + $0x2f0] sm:$0xff]
    %v1745 = vld [vmem:[#allocation8 + $0x2f8] sm:$0xff]
    %v1746 = vld [vmem:[#allocation8 + $0x300] sm:$0xff]
    %v1747 = vld [vmem:[#allocation8 + $0x308] sm:$0xff]
    %v1748 = vld [vmem:[#allocation8 + $0x310] sm:$0xff]
    %v1749 = vld [vmem:[#allocation8 + $0x318] sm:$0xff]
    %v1750 = vld [vmem:[#allocation8 + $0x320] sm:$0xff]
    %v1751 = vld [vmem:[#allocation8 + $0x328] sm:$0xff]
    %v1752 = vld [vmem:[#allocation8 + $0x330] sm:$0xff]
    %v1753 = vld [vmem:[#allocation8 + $0x338] sm:$0xff]
    %v1754 = vld [vmem:[#allocation8 + $0x340] sm:$0xff]
    %v1755 = vld [vmem:[#allocation8 + $0x348] sm:$0xff]
    %v1756 = vld [vmem:[#allocation8 + $0x350] sm:$0xff]
    %v1757 = vld [vmem:[#allocation8 + $0x358] sm:$0xff]
    %v1758 = vld [vmem:[#allocation8 + $0x360] sm:$0xff]
    %v1759 = vld [vmem:[#allocation8 + $0x368] sm:$0xff]
    %v1760 = vld [vmem:[#allocation8 + $0x370] sm:$0xff]
    %v1761 = vld [vmem:[#allocation8 + $0x378] sm:$0xff]
    %v1762 = vld [vmem:[#allocation8 + $0x380] sm:$0xff]
    %v1763 = vld [vmem:[#allocation8 + $0x388] sm:$0xff]
    %v1764 = vld [vmem:[#allocation8 + $0x390] sm:$0xff]
    %v1765 = vld [vmem:[#allocation8 + $0x398] sm:$0xff]
    %v1766 = vld [vmem:[#allocation8 + $0x3a0] sm:$0xff]
    %v1767 = vld [vmem:[#allocation8 + $0x3a8] sm:$0xff]
    %v1768 = vld [vmem:[#allocation8 + $0x3b0] sm:$0xff]
    %v1769 = vld [vmem:[#allocation8 + $0x3b8] sm:$0xff]
    %v1770 = vld [vmem:[#allocation8 + $0x3c0] sm:$0xff]
    %v1771 = vld [vmem:[#allocation8 + $0x3c8] sm:$0xff]
    %v1772 = vld [vmem:[#allocation8 + $0x3d0] sm:$0xff]
    %v1773 = vld [vmem:[#allocation8 + $0x3d8] sm:$0xff]
    %v1774 = vld [vmem:[#allocation8 + $0x3e0] sm:$0xff]
    %v1775 = vld [vmem:[#allocation8 + $0x3e8] sm:$0xff]
    %v1776 = vld [vmem:[#allocation8 + $0x3f0] sm:$0xff]
    %v1777 = vld [vmem:[#allocation8 + $0x3f8] sm:$0xff]
    %v1778 = vld [vmem:[%s4] sm:$0xf]
    %v1780 = vlaneseq
    %v1781 = vshrl.u32 %v1780, 7
    %v1782 = vsub.s32 0, %v1781
    %v1783 = vrot.slane %v1778, %v1782
    %v1784 = vlaneseq
    %v1785 = vshrl.u32 %v1784, 7
    %v1786 = vsub.s32 1, %v1785
    %v1787 = vrot.slane %v1778, %v1786
    %v1788 = vlaneseq
    %v1789 = vshrl.u32 %v1788, 7
    %v1790 = vsub.s32 2, %v1789
    %v1791 = vrot.slane %v1778, %v1790
    %v1792 = vlaneseq
    %v1793 = vshrl.u32 %v1792, 7
    %v1794 = vsub.s32 3, %v1793
    %v1795 = vrot.slane %v1778, %v1794
    %v1928 = vunpack.c.l.b16 %v1650
    %v1929 = vunpack.c.h.b16 %v1650
    %v1930 = vunpack.c.l.b16 %v1651
    %v1931 = vunpack.c.h.b16 %v1651
    %v1932 = vunpack.c.l.b16 %v1652
    %v1933 = vunpack.c.h.b16 %v1652
    %v1934 = vunpack.c.l.b16 %v1653
    %v1935 = vunpack.c.h.b16 %v1653
    %v1936 = vunpack.c.l.b16 %v1654
    %v1937 = vunpack.c.h.b16 %v1654
    %v1938 = vunpack.c.l.b16 %v1655
    %v1939 = vunpack.c.h.b16 %v1655
    %v1940 = vunpack.c.l.b16 %v1656
    %v1941 = vunpack.c.h.b16 %v1656
    %v1942 = vunpack.c.l.b16 %v1657
    %v1943 = vunpack.c.h.b16 %v1657
    %v1944 = vunpack.c.l.b16 %v1658
    %v1945 = vunpack.c.h.b16 %v1658
    %v1946 = vunpack.c.l.b16 %v1659
    %v1947 = vunpack.c.h.b16 %v1659
    %v1948 = vunpack.c.l.b16 %v1660
    %v1949 = vunpack.c.h.b16 %v1660
    %v1950 = vunpack.c.l.b16 %v1661
    %v1951 = vunpack.c.h.b16 %v1661
    %v1952 = vunpack.c.l.b16 %v1662
    %v1953 = vunpack.c.h.b16 %v1662
    %v1954 = vunpack.c.l.b16 %v1663
    %v1955 = vunpack.c.h.b16 %v1663
    %v1956 = vunpack.c.l.b16 %v1664
    %v1957 = vunpack.c.h.b16 %v1664
    %v1958 = vunpack.c.l.b16 %v1665
    %v1959 = vunpack.c.h.b16 %v1665
    %v1960 = vunpack.c.l.b16 %v1666
    %v1961 = vunpack.c.h.b16 %v1666
    %v1962 = vunpack.c.l.b16 %v1667
    %v1963 = vunpack.c.h.b16 %v1667
    %v1964 = vunpack.c.l.b16 %v1668
    %v1965 = vunpack.c.h.b16 %v1668
    %v1966 = vunpack.c.l.b16 %v1669
    %v1967 = vunpack.c.h.b16 %v1669
    %v1968 = vunpack.c.l.b16 %v1670
    %v1969 = vunpack.c.h.b16 %v1670
    %v1970 = vunpack.c.l.b16 %v1671
    %v1971 = vunpack.c.h.b16 %v1671
    %v1972 = vunpack.c.l.b16 %v1672
    %v1973 = vunpack.c.h.b16 %v1672
    %v1974 = vunpack.c.l.b16 %v1673
    %v1975 = vunpack.c.h.b16 %v1673
    %v1976 = vunpack.c.l.b16 %v1674
    %v1977 = vunpack.c.h.b16 %v1674
    %v1978 = vunpack.c.l.b16 %v1675
    %v1979 = vunpack.c.h.b16 %v1675
    %v1980 = vunpack.c.l.b16 %v1676
    %v1981 = vunpack.c.h.b16 %v1676
    %v1982 = vunpack.c.l.b16 %v1677
    %v1983 = vunpack.c.h.b16 %v1677
    %v1984 = vunpack.c.l.b16 %v1678
    %v1985 = vunpack.c.h.b16 %v1678
    %v1986 = vunpack.c.l.b16 %v1679
    %v1987 = vunpack.c.h.b16 %v1679
    %v1988 = vunpack.c.l.b16 %v1680
    %v1989 = vunpack.c.h.b16 %v1680
    %v1990 = vunpack.c.l.b16 %v1681
    %v1991 = vunpack.c.h.b16 %v1681
    %v1992 = vunpack.c.l.b16 %v1682
    %v1993 = vunpack.c.h.b16 %v1682
    %v1994 = vunpack.c.l.b16 %v1683
    %v1995 = vunpack.c.h.b16 %v1683
    %v1996 = vunpack.c.l.b16 %v1684
    %v1997 = vunpack.c.h.b16 %v1684
    %v1998 = vunpack.c.l.b16 %v1685
    %v1999 = vunpack.c.h.b16 %v1685
    %v2000 = vunpack.c.l.b16 %v1686
    %v2001 = vunpack.c.h.b16 %v1686
    %v2002 = vunpack.c.l.b16 %v1687
    %v2003 = vunpack.c.h.b16 %v1687
    %v2004 = vunpack.c.l.b16 %v1688
    %v2005 = vunpack.c.h.b16 %v1688
    %v2006 = vunpack.c.l.b16 %v1689
    %v2007 = vunpack.c.h.b16 %v1689
    %v2008 = vunpack.c.l.b16 %v1690
    %v2009 = vunpack.c.h.b16 %v1690
    %v2010 = vunpack.c.l.b16 %v1691
    %v2011 = vunpack.c.h.b16 %v1691
    %v2012 = vunpack.c.l.b16 %v1692
    %v2013 = vunpack.c.h.b16 %v1692
    %v2014 = vunpack.c.l.b16 %v1693
    %v2015 = vunpack.c.h.b16 %v1693
    %v2016 = vunpack.c.l.b16 %v1694
    %v2017 = vunpack.c.h.b16 %v1694
    %v2018 = vunpack.c.l.b16 %v1695
    %v2019 = vunpack.c.h.b16 %v1695
    %v2020 = vunpack.c.l.b16 %v1696
    %v2021 = vunpack.c.h.b16 %v1696
    %v2022 = vunpack.c.l.b16 %v1697
    %v2023 = vunpack.c.h.b16 %v1697
    %v2024 = vunpack.c.l.b16 %v1698
    %v2025 = vunpack.c.h.b16 %v1698
    %v2026 = vunpack.c.l.b16 %v1699
    %v2027 = vunpack.c.h.b16 %v1699
    %v2028 = vunpack.c.l.b16 %v1700
    %v2029 = vunpack.c.h.b16 %v1700
    %v2030 = vunpack.c.l.b16 %v1701
    %v2031 = vunpack.c.h.b16 %v1701
    %v2032 = vunpack.c.l.b16 %v1702
    %v2033 = vunpack.c.h.b16 %v1702
    %v2034 = vunpack.c.l.b16 %v1703
    %v2035 = vunpack.c.h.b16 %v1703
    %v2036 = vunpack.c.l.b16 %v1704
    %v2037 = vunpack.c.h.b16 %v1704
    %v2038 = vunpack.c.l.b16 %v1705
    %v2039 = vunpack.c.h.b16 %v1705
    %v2040 = vunpack.c.l.b16 %v1706
    %v2041 = vunpack.c.h.b16 %v1706
    %v2042 = vunpack.c.l.b16 %v1707
    %v2043 = vunpack.c.h.b16 %v1707
    %v2044 = vunpack.c.l.b16 %v1708
    %v2045 = vunpack.c.h.b16 %v1708
    %v2046 = vunpack.c.l.b16 %v1709
    %v2047 = vunpack.c.h.b16 %v1709
    %v2048 = vunpack.c.l.b16 %v1710
    %v2049 = vunpack.c.h.b16 %v1710
    %v2050 = vunpack.c.l.b16 %v1711
    %v2051 = vunpack.c.h.b16 %v1711
    %v2052 = vunpack.c.l.b16 %v1712
    %v2053 = vunpack.c.h.b16 %v1712
    %v2054 = vunpack.c.l.b16 %v1713
    %v2055 = vunpack.c.h.b16 %v1713
    %v2056 = vunpack.c.l.b16 %v1714
    %v2057 = vunpack.c.h.b16 %v1714
    %v2058 = vunpack.c.l.b16 %v1715
    %v2059 = vunpack.c.h.b16 %v1715
    %v2060 = vunpack.c.l.b16 %v1716
    %v2061 = vunpack.c.h.b16 %v1716
    %v2062 = vunpack.c.l.b16 %v1717
    %v2063 = vunpack.c.h.b16 %v1717
    %v2064 = vunpack.c.l.b16 %v1718
    %v2065 = vunpack.c.h.b16 %v1718
    %v2066 = vunpack.c.l.b16 %v1719
    %v2067 = vunpack.c.h.b16 %v1719
    %v2068 = vunpack.c.l.b16 %v1720
    %v2069 = vunpack.c.h.b16 %v1720
    %v2070 = vunpack.c.l.b16 %v1721
    %v2071 = vunpack.c.h.b16 %v1721
    %v2072 = vunpack.c.l.b16 %v1722
    %v2073 = vunpack.c.h.b16 %v1722
    %v2074 = vunpack.c.l.b16 %v1723
    %v2075 = vunpack.c.h.b16 %v1723
    %v2076 = vunpack.c.l.b16 %v1724
    %v2077 = vunpack.c.h.b16 %v1724
    %v2078 = vunpack.c.l.b16 %v1725
    %v2079 = vunpack.c.h.b16 %v1725
    %v2080 = vunpack.c.l.b16 %v1726
    %v2081 = vunpack.c.h.b16 %v1726
    %v2082 = vunpack.c.l.b16 %v1727
    %v2083 = vunpack.c.h.b16 %v1727
    %v2084 = vunpack.c.l.b16 %v1728
    %v2085 = vunpack.c.h.b16 %v1728
    %v2086 = vunpack.c.l.b16 %v1729
    %v2087 = vunpack.c.h.b16 %v1729
    %v2088 = vunpack.c.l.b16 %v1730
    %v2089 = vunpack.c.h.b16 %v1730
    %v2090 = vunpack.c.l.b16 %v1731
    %v2091 = vunpack.c.h.b16 %v1731
    %v2092 = vunpack.c.l.b16 %v1732
    %v2093 = vunpack.c.h.b16 %v1732
    %v2094 = vunpack.c.l.b16 %v1733
    %v2095 = vunpack.c.h.b16 %v1733
    %v2096 = vunpack.c.l.b16 %v1734
    %v2097 = vunpack.c.h.b16 %v1734
    %v2098 = vunpack.c.l.b16 %v1735
    %v2099 = vunpack.c.h.b16 %v1735
    %v2100 = vunpack.c.l.b16 %v1736
    %v2101 = vunpack.c.h.b16 %v1736
    %v2102 = vunpack.c.l.b16 %v1737
    %v2103 = vunpack.c.h.b16 %v1737
    %v2104 = vunpack.c.l.b16 %v1738
    %v2105 = vunpack.c.h.b16 %v1738
    %v2106 = vunpack.c.l.b16 %v1739
    %v2107 = vunpack.c.h.b16 %v1739
    %v2108 = vunpack.c.l.b16 %v1740
    %v2109 = vunpack.c.h.b16 %v1740
    %v2110 = vunpack.c.l.b16 %v1741
    %v2111 = vunpack.c.h.b16 %v1741
    %v2112 = vunpack.c.l.b16 %v1742
    %v2113 = vunpack.c.h.b16 %v1742
    %v2114 = vunpack.c.l.b16 %v1743
    %v2115 = vunpack.c.h.b16 %v1743
    %v2116 = vunpack.c.l.b16 %v1744
    %v2117 = vunpack.c.h.b16 %v1744
    %v2118 = vunpack.c.l.b16 %v1745
    %v2119 = vunpack.c.h.b16 %v1745
    %v2120 = vunpack.c.l.b16 %v1746
    %v2121 = vunpack.c.h.b16 %v1746
    %v2122 = vunpack.c.l.b16 %v1747
    %v2123 = vunpack.c.h.b16 %v1747
    %v2124 = vunpack.c.l.b16 %v1748
    %v2125 = vunpack.c.h.b16 %v1748
    %v2126 = vunpack.c.l.b16 %v1749
    %v2127 = vunpack.c.h.b16 %v1749
    %v2128 = vunpack.c.l.b16 %v1750
    %v2129 = vunpack.c.h.b16 %v1750
    %v2130 = vunpack.c.l.b16 %v1751
    %v2131 = vunpack.c.h.b16 %v1751
    %v2132 = vunpack.c.l.b16 %v1752
    %v2133 = vunpack.c.h.b16 %v1752
    %v2134 = vunpack.c.l.b16 %v1753
    %v2135 = vunpack.c.h.b16 %v1753
    %v2136 = vunpack.c.l.b16 %v1754
    %v2137 = vunpack.c.h.b16 %v1754
    %v2138 = vunpack.c.l.b16 %v1755
    %v2139 = vunpack.c.h.b16 %v1755
    %v2140 = vunpack.c.l.b16 %v1756
    %v2141 = vunpack.c.h.b16 %v1756
    %v2142 = vunpack.c.l.b16 %v1757
    %v2143 = vunpack.c.h.b16 %v1757
    %v2144 = vunpack.c.l.b16 %v1758
    %v2145 = vunpack.c.h.b16 %v1758
    %v2146 = vunpack.c.l.b16 %v1759
    %v2147 = vunpack.c.h.b16 %v1759
    %v2148 = vunpack.c.l.b16 %v1760
    %v2149 = vunpack.c.h.b16 %v1760
    %v2150 = vunpack.c.l.b16 %v1761
    %v2151 = vunpack.c.h.b16 %v1761
    %v2152 = vunpack.c.l.b16 %v1762
    %v2153 = vunpack.c.h.b16 %v1762
    %v2154 = vunpack.c.l.b16 %v1763
    %v2155 = vunpack.c.h.b16 %v1763
    %v2156 = vunpack.c.l.b16 %v1764
    %v2157 = vunpack.c.h.b16 %v1764
    %v2158 = vunpack.c.l.b16 %v1765
    %v2159 = vunpack.c.h.b16 %v1765
    %v2160 = vunpack.c.l.b16 %v1766
    %v2161 = vunpack.c.h.b16 %v1766
    %v2162 = vunpack.c.l.b16 %v1767
    %v2163 = vunpack.c.h.b16 %v1767
    %v2164 = vunpack.c.l.b16 %v1768
    %v2165 = vunpack.c.h.b16 %v1768
    %v2166 = vunpack.c.l.b16 %v1769
    %v2167 = vunpack.c.h.b16 %v1769
    %v2168 = vunpack.c.l.b16 %v1770
    %v2169 = vunpack.c.h.b16 %v1770
    %v2170 = vunpack.c.l.b16 %v1771
    %v2171 = vunpack.c.h.b16 %v1771
    %v2172 = vunpack.c.l.b16 %v1772
    %v2173 = vunpack.c.h.b16 %v1772
    %v2174 = vunpack.c.l.b16 %v1773
    %v2175 = vunpack.c.h.b16 %v1773
    %v2176 = vunpack.c.l.b16 %v1774
    %v2177 = vunpack.c.h.b16 %v1774
    %v2178 = vunpack.c.l.b16 %v1775
    %v2179 = vunpack.c.h.b16 %v1775
    %v2180 = vunpack.c.l.b16 %v1776
    %v2181 = vunpack.c.h.b16 %v1776
    %v2182 = vunpack.c.l.b16 %v1777
    %v2183 = vunpack.c.h.b16 %v1777
    %v2184 = vpack.c.b16 %v1932, %v1928
    %v2185 = vpack.c.b16 %v1933, %v1929
    %v2186 = vpack.c.b16 %v1934, %v1930
    %v2187 = vpack.c.b16 %v1935, %v1931
    %v2188 = vpack.c.b16 %v1940, %v1936
    %v2189 = vpack.c.b16 %v1941, %v1937
    %v2190 = vpack.c.b16 %v1942, %v1938
    %v2191 = vpack.c.b16 %v1943, %v1939
    %v2192 = vpack.c.b16 %v1948, %v1944
    %v2193 = vpack.c.b16 %v1949, %v1945
    %v2194 = vpack.c.b16 %v1950, %v1946
    %v2195 = vpack.c.b16 %v1951, %v1947
    %v2196 = vpack.c.b16 %v1956, %v1952
    %v2197 = vpack.c.b16 %v1957, %v1953
    %v2198 = vpack.c.b16 %v1958, %v1954
    %v2199 = vpack.c.b16 %v1959, %v1955
    %v2200 = vpack.c.b16 %v1964, %v1960
    %v2201 = vpack.c.b16 %v1965, %v1961
    %v2202 = vpack.c.b16 %v1966, %v1962
    %v2203 = vpack.c.b16 %v1967, %v1963
    %v2204 = vpack.c.b16 %v1972, %v1968
    %v2205 = vpack.c.b16 %v1973, %v1969
    %v2206 = vpack.c.b16 %v1974, %v1970
    %v2207 = vpack.c.b16 %v1975, %v1971
    %v2208 = vpack.c.b16 %v1980, %v1976
    %v2209 = vpack.c.b16 %v1981, %v1977
    %v2210 = vpack.c.b16 %v1982, %v1978
    %v2211 = vpack.c.b16 %v1983, %v1979
    %v2212 = vpack.c.b16 %v1988, %v1984
    %v2213 = vpack.c.b16 %v1989, %v1985
    %v2214 = vpack.c.b16 %v1990, %v1986
    %v2215 = vpack.c.b16 %v1991, %v1987
    %v2216 = vpack.c.b16 %v1996, %v1992
    %v2217 = vpack.c.b16 %v1997, %v1993
    %v2218 = vpack.c.b16 %v1998, %v1994
    %v2219 = vpack.c.b16 %v1999, %v1995
    %v2220 = vpack.c.b16 %v2004, %v2000
    %v2221 = vpack.c.b16 %v2005, %v2001
    %v2222 = vpack.c.b16 %v2006, %v2002
    %v2223 = vpack.c.b16 %v2007, %v2003
    %v2224 = vpack.c.b16 %v2012, %v2008
    %v2225 = vpack.c.b16 %v2013, %v2009
    %v2226 = vpack.c.b16 %v2014, %v2010
    %v2227 = vpack.c.b16 %v2015, %v2011
    %v2228 = vpack.c.b16 %v2020, %v2016
    %v2229 = vpack.c.b16 %v2021, %v2017
    %v2230 = vpack.c.b16 %v2022, %v2018
    %v2231 = vpack.c.b16 %v2023, %v2019
    %v2232 = vpack.c.b16 %v2028, %v2024
    %v2233 = vpack.c.b16 %v2029, %v2025
    %v2234 = vpack.c.b16 %v2030, %v2026
    %v2235 = vpack.c.b16 %v2031, %v2027
    %v2236 = vpack.c.b16 %v2036, %v2032
    %v2237 = vpack.c.b16 %v2037, %v2033
    %v2238 = vpack.c.b16 %v2038, %v2034
    %v2239 = vpack.c.b16 %v2039, %v2035
    %v2240 = vpack.c.b16 %v2044, %v2040
    %v2241 = vpack.c.b16 %v2045, %v2041
    %v2242 = vpack.c.b16 %v2046, %v2042
    %v2243 = vpack.c.b16 %v2047, %v2043
    %v2244 = vpack.c.b16 %v2052, %v2048
    %v2245 = vpack.c.b16 %v2053, %v2049
    %v2246 = vpack.c.b16 %v2054, %v2050
    %v2247 = vpack.c.b16 %v2055, %v2051
    %v2248 = vpack.c.b16 %v2060, %v2056
    %v2249 = vpack.c.b16 %v2061, %v2057
    %v2250 = vpack.c.b16 %v2062, %v2058
    %v2251 = vpack.c.b16 %v2063, %v2059
    %v2252 = vpack.c.b16 %v2068, %v2064
    %v2253 = vpack.c.b16 %v2069, %v2065
    %v2254 = vpack.c.b16 %v2070, %v2066
    %v2255 = vpack.c.b16 %v2071, %v2067
    %v2256 = vpack.c.b16 %v2076, %v2072
    %v2257 = vpack.c.b16 %v2077, %v2073
    %v2258 = vpack.c.b16 %v2078, %v2074
    %v2259 = vpack.c.b16 %v2079, %v2075
    %v2260 = vpack.c.b16 %v2084, %v2080
    %v2261 = vpack.c.b16 %v2085, %v2081
    %v2262 = vpack.c.b16 %v2086, %v2082
    %v2263 = vpack.c.b16 %v2087, %v2083
    %v2264 = vpack.c.b16 %v2092, %v2088
    %v2265 = vpack.c.b16 %v2093, %v2089
    %v2266 = vpack.c.b16 %v2094, %v2090
    %v2267 = vpack.c.b16 %v2095, %v2091
    %v2268 = vpack.c.b16 %v2100, %v2096
    %v2269 = vpack.c.b16 %v2101, %v2097
    %v2270 = vpack.c.b16 %v2102, %v2098
    %v2271 = vpack.c.b16 %v2103, %v2099
    %v2272 = vpack.c.b16 %v2108, %v2104
    %v2273 = vpack.c.b16 %v2109, %v2105
    %v2274 = vpack.c.b16 %v2110, %v2106
    %v2275 = vpack.c.b16 %v2111, %v2107
    %v2276 = vpack.c.b16 %v2116, %v2112
    %v2277 = vpack.c.b16 %v2117, %v2113
    %v2278 = vpack.c.b16 %v2118, %v2114
    %v2279 = vpack.c.b16 %v2119, %v2115
    %v2280 = vpack.c.b16 %v2124, %v2120
    %v2281 = vpack.c.b16 %v2125, %v2121
    %v2282 = vpack.c.b16 %v2126, %v2122
    %v2283 = vpack.c.b16 %v2127, %v2123
    %v2284 = vpack.c.b16 %v2132, %v2128
    %v2285 = vpack.c.b16 %v2133, %v2129
    %v2286 = vpack.c.b16 %v2134, %v2130
    %v2287 = vpack.c.b16 %v2135, %v2131
    %v2288 = vpack.c.b16 %v2140, %v2136
    %v2289 = vpack.c.b16 %v2141, %v2137
    %v2290 = vpack.c.b16 %v2142, %v2138
    %v2291 = vpack.c.b16 %v2143, %v2139
    %v2292 = vpack.c.b16 %v2148, %v2144
    %v2293 = vpack.c.b16 %v2149, %v2145
    %v2294 = vpack.c.b16 %v2150, %v2146
    %v2295 = vpack.c.b16 %v2151, %v2147
    %v2296 = vpack.c.b16 %v2156, %v2152
    %v2297 = vpack.c.b16 %v2157, %v2153
    %v2298 = vpack.c.b16 %v2158, %v2154
    %v2299 = vpack.c.b16 %v2159, %v2155
    %v2300 = vpack.c.b16 %v2164, %v2160
    %v2301 = vpack.c.b16 %v2165, %v2161
    %v2302 = vpack.c.b16 %v2166, %v2162
    %v2303 = vpack.c.b16 %v2167, %v2163
    %v2304 = vpack.c.b16 %v2172, %v2168
    %v2305 = vpack.c.b16 %v2173, %v2169
    %v2306 = vpack.c.b16 %v2174, %v2170
    %v2307 = vpack.c.b16 %v2175, %v2171
    %v2308 = vpack.c.b16 %v2180, %v2176
    %v2309 = vpack.c.b16 %v2181, %v2177
    %v2310 = vpack.c.b16 %v2182, %v2178
    %v2311 = vpack.c.b16 %v2183, %v2179
    %2440 = vmatprep.subr.bf16.mxu0 %v2213
    %2441 = vmatpush1.bf16.msra.mxu0 %v2212
    %2442 = vmatprep.subr.bf16.mxu0 %v2209
    %2443 = vmatpush1.bf16.msra.mxu0 %v2208
    %2444 = vmatprep.subr.bf16.mxu0 %v2205
    %2445 = vmatpush1.bf16.msra.mxu0 %v2204
    %2446 = vmatprep.subr.bf16.mxu0 %v2201
    %2447 = vmatpush1.bf16.msra.mxu0 %v2200
    %2448 = vmatprep.subr.bf16.mxu0 %v2197
    %2449 = vmatpush1.bf16.msra.mxu0 %v2196
    %2450 = vmatprep.subr.bf16.mxu0 %v2193
    %2451 = vmatpush1.bf16.msra.mxu0 %v2192
    %2452 = vmatprep.subr.bf16.mxu0 %v2189
    %2453 = vmatpush1.bf16.msra.mxu0 %v2188
    %2454 = vmatprep.subr.bf16.mxu0 %v2185
    %2455 = vmatpush1.bf16.msra.mxu0 %v2184
    %2456 = vmatprep.subr.bf16.mxu0 %v2245
    %2457 = vmatpush2.bf16.msra.mxu0 %v2244
    %2458 = vmatprep.subr.bf16.mxu0 %v2241
    %2459 = vmatpush2.bf16.msra.mxu0 %v2240
    %2460 = vmatprep.subr.bf16.mxu0 %v2237
    %2461 = vmatpush2.bf16.msra.mxu0 %v2236
    %2462 = vmatprep.subr.bf16.mxu0 %v2233
    %2463 = vmatpush2.bf16.msra.mxu0 %v2232
    %2464 = vmatprep.subr.bf16.mxu0 %v2229
    %2465 = vmatpush2.bf16.msra.mxu0 %v2228
    %2466 = vmatprep.subr.bf16.mxu0 %v2225
    %2467 = vmatpush2.bf16.msra.mxu0 %v2224
    %2468 = vmatprep.subr.bf16.mxu0 %v2221
    %2469 = vmatpush2.bf16.msra.mxu0 %v2220
    %2470 = vmatprep.subr.bf16.mxu0 %v2217
    %2471 = vmatpush2.bf16.msra.mxu0 %v2216
    %2472 = vmatprep.mubr.bf16.mxu0 %v1647
    %2473 = vmatmul.mubr.bf16.gmra.mxu0 %v1646
    %v2474 = vpop.f32.mrf.mxu0
    %v2475 = vadd.f32 %v1783, %v2474
    %v2476 = vpop.f32.mrf.mxu0
    %v2477 = vadd.f32 %v1787, %v2476
    %v2478 = vpop.f32.mrf.mxu0
    %v2479 = vpop.f32.mrf.mxu0
    %2480 = vdwg.mxu0
    %2481 = vmatprep.subr.bf16.mxu0 %v2277
    %2482 = vmatpush1.bf16.msra.mxu0 %v2276
    %2483 = vmatprep.subr.bf16.mxu0 %v2273
    %2484 = vmatpush1.bf16.msra.mxu0 %v2272
    %2485 = vmatprep.subr.bf16.mxu0 %v2269
    %2486 = vmatpush1.bf16.msra.mxu0 %v2268
    %2487 = vmatprep.subr.bf16.mxu0 %v2265
    %2488 = vmatpush1.bf16.msra.mxu0 %v2264
    %2489 = vmatprep.subr.bf16.mxu0 %v2261
    %2490 = vmatpush1.bf16.msra.mxu0 %v2260
    %2491 = vmatprep.subr.bf16.mxu0 %v2257
    %2492 = vmatpush1.bf16.msra.mxu0 %v2256
    %2493 = vmatprep.subr.bf16.mxu0 %v2253
    %2494 = vmatpush1.bf16.msra.mxu0 %v2252
    %2495 = vmatprep.subr.bf16.mxu0 %v2249
    %2496 = vmatpush1.bf16.msra.mxu0 %v2248
    %2497 = vmatprep.subr.bf16.mxu0 %v2309
    %2498 = vmatpush2.bf16.msra.mxu0 %v2308
    %2499 = vmatprep.subr.bf16.mxu0 %v2305
    %2500 = vmatpush2.bf16.msra.mxu0 %v2304
    %2501 = vmatprep.subr.bf16.mxu0 %v2301
    %2502 = vmatpush2.bf16.msra.mxu0 %v2300
    %2503 = vmatprep.subr.bf16.mxu0 %v2297
    %2504 = vmatpush2.bf16.msra.mxu0 %v2296
    %2505 = vmatprep.subr.bf16.mxu0 %v2293
    %2506 = vmatpush2.bf16.msra.mxu0 %v2292
    %2507 = vmatprep.subr.bf16.mxu0 %v2289
    %2508 = vmatpush2.bf16.msra.mxu0 %v2288
    %2509 = vmatprep.subr.bf16.mxu0 %v2285
    %2510 = vmatpush2.bf16.msra.mxu0 %v2284
    %2511 = vmatprep.subr.bf16.mxu0 %v2281
    %2512 = vmatpush2.bf16.msra.mxu0 %v2280
    %2513 = vmatprep.mubr.bf16.mxu0 %v1649
    %2514 = vmatmul.mubr.bf16.gmra.mxu0 %v1648
    %v2515 = vpop.f32.mrf.mxu0
    %v2516 = vadd.f32 %v2475, %v2515
    %v2517 = vpop.f32.mrf.mxu0
    %v2518 = vadd.f32 %v2477, %v2517
    %v2519 = vpop.f32.mrf.mxu0
    %v2520 = vpop.f32.mrf.mxu0
    %2521 = vdwg.mxu0
    %2522 = vmatprep.subr.bf16.mxu0 %v2215
    %2523 = vmatpush1.bf16.msra.mxu0 %v2214
    %2524 = vmatprep.subr.bf16.mxu0 %v2211
    %2525 = vmatpush1.bf16.msra.mxu0 %v2210
    %2526 = vmatprep.subr.bf16.mxu0 %v2207
    %2527 = vmatpush1.bf16.msra.mxu0 %v2206
    %2528 = vmatprep.subr.bf16.mxu0 %v2203
    %2529 = vmatpush1.bf16.msra.mxu0 %v2202
    %2530 = vmatprep.subr.bf16.mxu0 %v2199
    %2531 = vmatpush1.bf16.msra.mxu0 %v2198
    %2532 = vmatprep.subr.bf16.mxu0 %v2195
    %2533 = vmatpush1.bf16.msra.mxu0 %v2194
    %2534 = vmatprep.subr.bf16.mxu0 %v2191
    %2535 = vmatpush1.bf16.msra.mxu0 %v2190
    %2536 = vmatprep.subr.bf16.mxu0 %v2187
    %2537 = vmatpush1.bf16.msra.mxu0 %v2186
    %2538 = vmatprep.subr.bf16.mxu0 %v2247
    %2539 = vmatpush2.bf16.msra.mxu0 %v2246
    %2540 = vmatprep.subr.bf16.mxu0 %v2243
    %2541 = vmatpush2.bf16.msra.mxu0 %v2242
    %2542 = vmatprep.subr.bf16.mxu0 %v2239
    %2543 = vmatpush2.bf16.msra.mxu0 %v2238
    %2544 = vmatprep.subr.bf16.mxu0 %v2235
    %2545 = vmatpush2.bf16.msra.mxu0 %v2234
    %2546 = vmatprep.subr.bf16.mxu0 %v2231
    %2547 = vmatpush2.bf16.msra.mxu0 %v2230
    %2548 = vmatprep.subr.bf16.mxu0 %v2227
    %2549 = vmatpush2.bf16.msra.mxu0 %v2226
    %2550 = vmatprep.subr.bf16.mxu0 %v2223
    %2551 = vmatpush2.bf16.msra.mxu0 %v2222
    %2552 = vmatprep.subr.bf16.mxu0 %v2219
    %2553 = vmatpush2.bf16.msra.mxu0 %v2218
    %2554 = vmatprep.mubr.bf16.mxu0 %v1647
    %2555 = vmatmul.mubr.bf16.gmra.mxu0 %v1646
    %v2556 = vpop.f32.mrf.mxu0
    %v2557 = vadd.f32 %v1791, %v2556
    %v2558 = vpop.f32.mrf.mxu0
    %v2559 = vadd.f32 %v1795, %v2558
    %v2560 = vpop.f32.mrf.mxu0
    %v2561 = vpop.f32.mrf.mxu0
    %2562 = vdwg.mxu0
    %2563 = vmatprep.subr.bf16.mxu0 %v2279
    %2564 = vmatpush1.bf16.msra.mxu0 %v2278
    %2565 = vmatprep.subr.bf16.mxu0 %v2275
    %2566 = vmatpush1.bf16.msra.mxu0 %v2274
    %2567 = vmatprep.subr.bf16.mxu0 %v2271
    %2568 = vmatpush1.bf16.msra.mxu0 %v2270
    %2569 = vmatprep.subr.bf16.mxu0 %v2267
    %2570 = vmatpush1.bf16.msra.mxu0 %v2266
    %2571 = vmatprep.subr.bf16.mxu0 %v2263
    %2572 = vmatpush1.bf16.msra.mxu0 %v2262
    %2573 = vmatprep.subr.bf16.mxu0 %v2259
    %2574 = vmatpush1.bf16.msra.mxu0 %v2258
    %2575 = vmatprep.subr.bf16.mxu0 %v2255
    %2576 = vmatpush1.bf16.msra.mxu0 %v2254
    %2577 = vmatprep.subr.bf16.mxu0 %v2251
    %2578 = vmatpush1.bf16.msra.mxu0 %v2250
    %2579 = vmatprep.subr.bf16.mxu0 %v2311
    %2580 = vmatpush2.bf16.msra.mxu0 %v2310
    %2581 = vmatprep.subr.bf16.mxu0 %v2307
    %2582 = vmatpush2.bf16.msra.mxu0 %v2306
    %2583 = vmatprep.subr.bf16.mxu0 %v2303
    %2584 = vmatpush2.bf16.msra.mxu0 %v2302
    %2585 = vmatprep.subr.bf16.mxu0 %v2299
    %2586 = vmatpush2.bf16.msra.mxu0 %v2298
    %2587 = vmatprep.subr.bf16.mxu0 %v2295
    %2588 = vmatpush2.bf16.msra.mxu0 %v2294
    %2589 = vmatprep.subr.bf16.mxu0 %v2291
    %2590 = vmatpush2.bf16.msra.mxu0 %v2290
    %2591 = vmatprep.subr.bf16.mxu0 %v2287
    %2592 = vmatpush2.bf16.msra.mxu0 %v2286
    %2593 = vmatprep.subr.bf16.mxu0 %v2283
    %2594 = vmatpush2.bf16.msra.mxu0 %v2282
    %2595 = vmatprep.mubr.bf16.mxu0 %v1649
    %2596 = vmatmul.mubr.bf16.gmra.mxu0 %v1648
    %v2597 = vpop.f32.mrf.mxu0
    %v2598 = vadd.f32 %v2557, %v2597
    %v2599 = vpop.f32.mrf.mxu0
    %v2600 = vadd.f32 %v2559, %v2599
    %v2601 = vpop.f32.mrf.mxu0
    %v2602 = vpop.f32.mrf.mxu0
    %2603 = vdwg.mxu0
    %v2604 = vmax.f32 %v2516, 0.0
    %v2605 = vmax.f32 %v2518, 0.0
    %v2606 = vmax.f32 %v2598, 0.0
    %v2607 = vmax.f32 %v2600, 0.0
    %v2608 = vpack.c.bf16 %v2604, %v2604
    %v2609 = vpack.c.bf16 %v2605, %v2605
    %v2610 = vpack.c.bf16 %v2606, %v2606
    %v2611 = vpack.c.bf16 %v2607, %v2607
    %v2612 = vld [vmem:[#allocation10] sm:$0xf]
    %v2613 = vld [vmem:[#allocation10 + $0x4] sm:$0xf]
    %v2614 = vld [vmem:[#allocation10 + $0x8] sm:$0xf]
    %v2615 = vld [vmem:[#allocation10 + $0xc] sm:$0xf]
    %v2616 = vld [vmem:[#allocation10 + $0x10] sm:$0xf]
    %v2617 = vld [vmem:[#allocation10 + $0x14] sm:$0xf]
    %v2618 = vld [vmem:[#allocation10 + $0x18] sm:$0xf]
    %v2619 = vld [vmem:[#allocation10 + $0x1c] sm:$0xf]
    %v2620 = vld [vmem:[#allocation10 + $0x20] sm:$0xf]
    %v2621 = vld [vmem:[#allocation10 + $0x24] sm:$0xf]
    %v2622 = vld [vmem:[#allocation10 + $0x28] sm:$0xf]
    %v2623 = vld [vmem:[#allocation10 + $0x2c] sm:$0xf]
    %v2624 = vld [vmem:[#allocation10 + $0x30] sm:$0xf]
    %v2625 = vld [vmem:[#allocation10 + $0x34] sm:$0xf]
    %v2626 = vld [vmem:[#allocation10 + $0x38] sm:$0xf]
    %v2627 = vld [vmem:[#allocation10 + $0x3c] sm:$0xf]
    %v2628 = vld [vmem:[#allocation10 + $0x40] sm:$0xf]
    %v2629 = vld [vmem:[#allocation10 + $0x44] sm:$0xf]
    %v2630 = vld [vmem:[#allocation10 + $0x48] sm:$0xf]
    %v2631 = vld [vmem:[#allocation10 + $0x4c] sm:$0xf]
    %v2632 = vld [vmem:[#allocation10 + $0x50] sm:$0xf]
    %v2633 = vld [vmem:[#allocation10 + $0x54] sm:$0xf]
    %v2634 = vld [vmem:[#allocation10 + $0x58] sm:$0xf]
    %v2635 = vld [vmem:[#allocation10 + $0x5c] sm:$0xf]
    %v2636 = vld [vmem:[#allocation10 + $0x60] sm:$0xf]
    %v2637 = vld [vmem:[#allocation10 + $0x64] sm:$0xf]
    %v2638 = vld [vmem:[#allocation10 + $0x68] sm:$0xf]
    %v2639 = vld [vmem:[#allocation10 + $0x6c] sm:$0xf]
    %v2640 = vld [vmem:[#allocation10 + $0x70] sm:$0xf]
    %v2641 = vld [vmem:[#allocation10 + $0x74] sm:$0xf]
    %v2642 = vld [vmem:[#allocation10 + $0x78] sm:$0xf]
    %v2643 = vld [vmem:[#allocation10 + $0x7c] sm:$0xf]
    %v2644 = vld [vmem:[#allocation10 + $0x80] sm:$0xf]
    %v2645 = vld [vmem:[#allocation10 + $0x84] sm:$0xf]
    %v2646 = vld [vmem:[#allocation10 + $0x88] sm:$0xf]
    %v2647 = vld [vmem:[#allocation10 + $0x8c] sm:$0xf]
    %v2648 = vld [vmem:[#allocation10 + $0x90] sm:$0xf]
    %v2649 = vld [vmem:[#allocation10 + $0x94] sm:$0xf]
    %v2650 = vld [vmem:[#allocation10 + $0x98] sm:$0xf]
    %v2651 = vld [vmem:[#allocation10 + $0x9c] sm:$0xf]
    %v2652 = vld [vmem:[#allocation10 + $0xa0] sm:$0xf]
    %v2653 = vld [vmem:[#allocation10 + $0xa4] sm:$0xf]
    %v2654 = vld [vmem:[#allocation10 + $0xa8] sm:$0xf]
    %v2655 = vld [vmem:[#allocation10 + $0xac] sm:$0xf]
    %v2656 = vld [vmem:[#allocation10 + $0xb0] sm:$0xf]
    %v2657 = vld [vmem:[#allocation10 + $0xb4] sm:$0xf]
    %v2658 = vld [vmem:[#allocation10 + $0xb8] sm:$0xf]
    %v2659 = vld [vmem:[#allocation10 + $0xbc] sm:$0xf]
    %v2660 = vld [vmem:[#allocation10 + $0xc0] sm:$0xf]
    %v2661 = vld [vmem:[#allocation10 + $0xc4] sm:$0xf]
    %v2662 = vld [vmem:[#allocation10 + $0xc8] sm:$0xf]
    %v2663 = vld [vmem:[#allocation10 + $0xcc] sm:$0xf]
    %v2664 = vld [vmem:[#allocation10 + $0xd0] sm:$0xf]
    %v2665 = vld [vmem:[#allocation10 + $0xd4] sm:$0xf]
    %v2666 = vld [vmem:[#allocation10 + $0xd8] sm:$0xf]
    %v2667 = vld [vmem:[#allocation10 + $0xdc] sm:$0xf]
    %v2668 = vld [vmem:[#allocation10 + $0xe0] sm:$0xf]
    %v2669 = vld [vmem:[#allocation10 + $0xe4] sm:$0xf]
    %v2670 = vld [vmem:[#allocation10 + $0xe8] sm:$0xf]
    %v2671 = vld [vmem:[#allocation10 + $0xec] sm:$0xf]
    %v2672 = vld [vmem:[#allocation10 + $0xf0] sm:$0xf]
    %v2673 = vld [vmem:[#allocation10 + $0xf4] sm:$0xf]
    %v2674 = vld [vmem:[#allocation10 + $0xf8] sm:$0xf]
    %v2675 = vld [vmem:[#allocation10 + $0xfc] sm:$0xf]
    %v2676 = vld [vmem:[%s6] sm:$0x1]
    %v2678 = vlaneseq
    %v2679 = vshrl.u32 %v2678, 7
    %v2680 = vsub.s32 0, %v2679
    %v2681 = vrot.slane %v2676, %v2680
    %v2747 = vunpack.c.l.b16 %v2612
    %v2748 = vunpack.c.l.b16 %v2613
    %v2749 = vunpack.c.l.b16 %v2614
    %v2750 = vunpack.c.l.b16 %v2615
    %v2751 = vunpack.c.l.b16 %v2616
    %v2752 = vunpack.c.l.b16 %v2617
    %v2753 = vunpack.c.l.b16 %v2618
    %v2754 = vunpack.c.l.b16 %v2619
    %v2755 = vunpack.c.l.b16 %v2620
    %v2756 = vunpack.c.l.b16 %v2621
    %v2757 = vunpack.c.l.b16 %v2622
    %v2758 = vunpack.c.l.b16 %v2623
    %v2759 = vunpack.c.l.b16 %v2624
    %v2760 = vunpack.c.l.b16 %v2625
    %v2761 = vunpack.c.l.b16 %v2626
    %v2762 = vunpack.c.l.b16 %v2627
    %v2763 = vunpack.c.l.b16 %v2628
    %v2764 = vunpack.c.l.b16 %v2629
    %v2765 = vunpack.c.l.b16 %v2630
    %v2766 = vunpack.c.l.b16 %v2631
    %v2767 = vunpack.c.l.b16 %v2632
    %v2768 = vunpack.c.l.b16 %v2633
    %v2769 = vunpack.c.l.b16 %v2634
    %v2770 = vunpack.c.l.b16 %v2635
    %v2771 = vunpack.c.l.b16 %v2636
    %v2772 = vunpack.c.l.b16 %v2637
    %v2773 = vunpack.c.l.b16 %v2638
    %v2774 = vunpack.c.l.b16 %v2639
    %v2775 = vunpack.c.l.b16 %v2640
    %v2776 = vunpack.c.l.b16 %v2641
    %v2777 = vunpack.c.l.b16 %v2642
    %v2778 = vunpack.c.l.b16 %v2643
    %v2779 = vunpack.c.l.b16 %v2644
    %v2780 = vunpack.c.l.b16 %v2645
    %v2781 = vunpack.c.l.b16 %v2646
    %v2782 = vunpack.c.l.b16 %v2647
    %v2783 = vunpack.c.l.b16 %v2648
    %v2784 = vunpack.c.l.b16 %v2649
    %v2785 = vunpack.c.l.b16 %v2650
    %v2786 = vunpack.c.l.b16 %v2651
    %v2787 = vunpack.c.l.b16 %v2652
    %v2788 = vunpack.c.l.b16 %v2653
    %v2789 = vunpack.c.l.b16 %v2654
    %v2790 = vunpack.c.l.b16 %v2655
    %v2791 = vunpack.c.l.b16 %v2656
    %v2792 = vunpack.c.l.b16 %v2657
    %v2793 = vunpack.c.l.b16 %v2658
    %v2794 = vunpack.c.l.b16 %v2659
    %v2795 = vunpack.c.l.b16 %v2660
    %v2796 = vunpack.c.l.b16 %v2661
    %v2797 = vunpack.c.l.b16 %v2662
    %v2798 = vunpack.c.l.b16 %v2663
    %v2799 = vunpack.c.l.b16 %v2664
    %v2800 = vunpack.c.l.b16 %v2665
    %v2801 = vunpack.c.l.b16 %v2666
    %v2802 = vunpack.c.l.b16 %v2667
    %v2803 = vunpack.c.l.b16 %v2668
    %v2804 = vunpack.c.l.b16 %v2669
    %v2805 = vunpack.c.l.b16 %v2670
    %v2806 = vunpack.c.l.b16 %v2671
    %v2807 = vunpack.c.l.b16 %v2672
    %v2808 = vunpack.c.l.b16 %v2673
    %v2809 = vunpack.c.l.b16 %v2674
    %v2810 = vunpack.c.l.b16 %v2675
    %v2811 = vpack.c.b16 %v2748, %v2747
    %v2812 = vpack.c.b16 %v2750, %v2749
    %v2813 = vpack.c.b16 %v2752, %v2751
    %v2814 = vpack.c.b16 %v2754, %v2753
    %v2815 = vpack.c.b16 %v2756, %v2755
    %v2816 = vpack.c.b16 %v2758, %v2757
    %v2817 = vpack.c.b16 %v2760, %v2759
    %v2818 = vpack.c.b16 %v2762, %v2761
    %v2819 = vpack.c.b16 %v2764, %v2763
    %v2820 = vpack.c.b16 %v2766, %v2765
    %v2821 = vpack.c.b16 %v2768, %v2767
    %v2822 = vpack.c.b16 %v2770, %v2769
    %v2823 = vpack.c.b16 %v2772, %v2771
    %v2824 = vpack.c.b16 %v2774, %v2773
    %v2825 = vpack.c.b16 %v2776, %v2775
    %v2826 = vpack.c.b16 %v2778, %v2777
    %v2827 = vpack.c.b16 %v2780, %v2779
    %v2828 = vpack.c.b16 %v2782, %v2781
    %v2829 = vpack.c.b16 %v2784, %v2783
    %v2830 = vpack.c.b16 %v2786, %v2785
    %v2831 = vpack.c.b16 %v2788, %v2787
    %v2832 = vpack.c.b16 %v2790, %v2789
    %v2833 = vpack.c.b16 %v2792, %v2791
    %v2834 = vpack.c.b16 %v2794, %v2793
    %v2835 = vpack.c.b16 %v2796, %v2795
    %v2836 = vpack.c.b16 %v2798, %v2797
    %v2837 = vpack.c.b16 %v2800, %v2799
    %v2838 = vpack.c.b16 %v2802, %v2801
    %v2839 = vpack.c.b16 %v2804, %v2803
    %v2840 = vpack.c.b16 %v2806, %v2805
    %v2841 = vpack.c.b16 %v2808, %v2807
    %v2842 = vpack.c.b16 %v2810, %v2809
    %2875 = vmatprep.subr.bf16.mxu0 0
    %2876 = vmatpush1.bf16.msra.mxu0 %v2818
    %2877 = vmatprep.subr.bf16.mxu0 0
    %2878 = vmatpush1.bf16.msra.mxu0 %v2817
    %2879 = vmatprep.subr.bf16.mxu0 0
    %2880 = vmatpush1.bf16.msra.mxu0 %v2816
    %2881 = vmatprep.subr.bf16.mxu0 0
    %2882 = vmatpush1.bf16.msra.mxu0 %v2815
    %2883 = vmatprep.subr.bf16.mxu0 0
    %2884 = vmatpush1.bf16.msra.mxu0 %v2814
    %2885 = vmatprep.subr.bf16.mxu0 0
    %2886 = vmatpush1.bf16.msra.mxu0 %v2813
    %2887 = vmatprep.subr.bf16.mxu0 0
    %2888 = vmatpush1.bf16.msra.mxu0 %v2812
    %2889 = vmatprep.subr.bf16.mxu0 0
    %2890 = vmatpush1.bf16.msra.mxu0 %v2811
    %2891 = vmatprep.subr.bf16.mxu0 0
    %2892 = vmatpush2.bf16.msra.mxu0 %v2826
    %2893 = vmatprep.subr.bf16.mxu0 0
    %2894 = vmatpush2.bf16.msra.mxu0 %v2825
    %2895 = vmatprep.subr.bf16.mxu0 0
    %2896 = vmatpush2.bf16.msra.mxu0 %v2824
    %2897 = vmatprep.subr.bf16.mxu0 0
    %2898 = vmatpush2.bf16.msra.mxu0 %v2823
    %2899 = vmatprep.subr.bf16.mxu0 0
    %2900 = vmatpush2.bf16.msra.mxu0 %v2822
    %2901 = vmatprep.subr.bf16.mxu0 0
    %2902 = vmatpush2.bf16.msra.mxu0 %v2821
    %2903 = vmatprep.subr.bf16.mxu0 0
    %2904 = vmatpush2.bf16.msra.mxu0 %v2820
    %2905 = vmatprep.subr.bf16.mxu0 0
    %2906 = vmatpush2.bf16.msra.mxu0 %v2819
    %2907 = vmatprep.mubr.bf16.mxu0 %v2609
    %2908 = vmatmul.mubr.bf16.gmra.mxu0 %v2608
    %v2909 = vpop.f32.mrf.mxu0
    %v2910 = vadd.f32 %v2681, %v2909
    %v2911 = vpop.f32.mrf.mxu0
    %v2912 = vpop.f32.mrf.mxu0
    %v2913 = vpop.f32.mrf.mxu0
    %2914 = vdwg.mxu0
    %2915 = vmatprep.subr.bf16.mxu0 0
    %2916 = vmatpush1.bf16.msra.mxu0 %v2834
    %2917 = vmatprep.subr.bf16.mxu0 0
    %2918 = vmatpush1.bf16.msra.mxu0 %v2833
    %2919 = vmatprep.subr.bf16.mxu0 0
    %2920 = vmatpush1.bf16.msra.mxu0 %v2832
    %2921 = vmatprep.subr.bf16.mxu0 0
    %2922 = vmatpush1.bf16.msra.mxu0 %v2831
    %2923 = vmatprep.subr.bf16.mxu0 0
    %2924 = vmatpush1.bf16.msra.mxu0 %v2830
    %2925 = vmatprep.subr.bf16.mxu0 0
    %2926 = vmatpush1.bf16.msra.mxu0 %v2829
    %2927 = vmatprep.subr.bf16.mxu0 0
    %2928 = vmatpush1.bf16.msra.mxu0 %v2828
    %2929 = vmatprep.subr.bf16.mxu0 0
    %2930 = vmatpush1.bf16.msra.mxu0 %v2827
    %2931 = vmatprep.subr.bf16.mxu0 0
    %2932 = vmatpush2.bf16.msra.mxu0 %v2842
    %2933 = vmatprep.subr.bf16.mxu0 0
    %2934 = vmatpush2.bf16.msra.mxu0 %v2841
    %2935 = vmatprep.subr.bf16.mxu0 0
    %2936 = vmatpush2.bf16.msra.mxu0 %v2840
    %2937 = vmatprep.subr.bf16.mxu0 0
    %2938 = vmatpush2.bf16.msra.mxu0 %v2839
    %2939 = vmatprep.subr.bf16.mxu0 0
    %2940 = vmatpush2.bf16.msra.mxu0 %v2838
    %2941 = vmatprep.subr.bf16.mxu0 0
    %2942 = vmatpush2.bf16.msra.mxu0 %v2837
    %2943 = vmatprep.subr.bf16.mxu0 0
    %2944 = vmatpush2.bf16.msra.mxu0 %v2836
    %2945 = vmatprep.subr.bf16.mxu0 0
    %2946 = vmatpush2.bf16.msra.mxu0 %v2835
    %2947 = vmatprep.mubr.bf16.mxu0 %v2611
    %2948 = vmatmul.mubr.bf16.gmra.mxu0 %v2610
    %v2949 = vpop.f32.mrf.mxu0
    %v2950 = vadd.f32 %v2910, %v2949
    %v2951 = vpop.f32.mrf.mxu0
    %v2952 = vpop.f32.mrf.mxu0
    %v2953 = vpop.f32.mrf.mxu0
    %2954 = vdwg.mxu0
    %v2955 = vpack.c.bf16 %v2950, %v2950
    %2956 = vst [vmem:[#allocation11] sm:$0x3] %v2955
    // Predicated region
    $region50: #{tpu_custom_call.1} parent=1 // pred_check
      _
    $region51: #{tpu_custom_call.1} parent=1 // pred_check_branch
      %2958 = sbr.rel (0) target = $region53
    $region52: #{tpu_custom_call.1} parent=1 // pred_region
      %s2960 = ssub.s32 32, 32
      %2961 = vsyncadd [#allocation4], %s2960
      %s2963 = sshll.u32 [#allocation11], 4
      %s2964 = int_to_ptr.vmem [resolvable:$true] %s2963
      %2966 = dma.vmem_to_hbm [thread:$0]  %s2964, 32, %s7, [#allocation4]
    $region53: #{tpu_custom_call.1} parent=1 // pred_fallthru
      _
    // Predicated region
    $region54: #{tpu_custom_call.1} parent=1 // pred_check
      _
    $region55: #{tpu_custom_call.1} parent=1 // pred_check_branch
      %2968 = sbr.rel (0) target = $region57
    $region56: #{tpu_custom_call.1} parent=1 // pred_region
      %2969 = dma.done [#allocation4], 32
    $region57: #{tpu_custom_call.1} parent=1 // pred_fallthru
      _
    %2970 = vsyncpa [#allocation3], 1
    %2971 = vsyncpa [#allocation6], 1
    %2972 = vsyncpa [#allocation9], 1
    %2973 = vsyncpa [#allocation4], 1

</llo_original>
